<compile_context>
chip_gen: v7x
topology: tpu7x:2x2x1
jax: 0.10.0
libtpu: 0.0.40
codegen_flags: <defaults>
</compile_context>

<pallas_src>
import functools
import math

import jax
import jax.numpy as jnp
from jax.experimental import pallas as pl
from jax.experimental.pallas import tpu as pltpu


def _attn_block_kernel(x_ref, wqkv_ref, bqkv_ref, wo_ref, bo_ref,
                       gamma_ref, beta_ref, o_ref,
                       *, num_heads, head_dim, eps):
    E = num_heads * head_dim
    # x block: (1, S, E) -> single batch element, native dtype for the MXU.
    x = x_ref[0]                                            # (S, E)

    # Fused in-projection: one wide (S,E)x(E,3E) MXU matmul, f32 accumulate.
    # The 1/sqrt(Dh) softmax scale is already folded into the q columns of
    # wqkv / bqkv on the host.
    qkv = jnp.dot(x, wqkv_ref[...],
                  preferred_element_type=jnp.float32) + bqkv_ref[...]   # (S, 3E)

    # Residual + output-projection bias folded into the accumulator init:
    # the final (x + attn_out + bo) is built up head by head below.
    acc = x.astype(jnp.float32) + bo_ref[...]               # (S, E) f32

    # Per-head attention; output projection accumulated per head.  wo_ref is
    # pre-arranged on the host as (H, Dh, E) so wo_ref[h] is a cheap leading-dim
    # index (no sublane/lane slicing of the weight).
    for h in range(num_heads):
        lo = h * head_dim
        qh = qkv[:, lo:lo + head_dim]                       # (S, Dh), scale pre-applied
        kh = qkv[:, E + lo:E + lo + head_dim]               # (S, Dh)
        vh = qkv[:, 2 * E + lo:2 * E + lo + head_dim]       # (S, Dh)

        # scores[a, b] = sum_d qh[a, d] * kh[b, d]
        s = jax.lax.dot_general(qh, kh, (((1,), (1,)), ((), ())),
                                preferred_element_type=jnp.float32)     # (S, S)
        s = s - jnp.max(s, axis=-1, keepdims=True)
        p = jnp.exp(s)
        l = jnp.sum(p, axis=-1, keepdims=True)              # (S, 1)

        # Unnormalized PV; fold 1/l in once on the narrow (S, Dh) result.
        oh = jnp.dot(p, vh, preferred_element_type=jnp.float32)         # (S, Dh)
        oh = oh * pl.reciprocal(l, approx=True)

        acc = acc + jnp.dot(oh, wo_ref[h],
                            preferred_element_type=jnp.float32)         # (S, E)

    # LayerNorm over the embedding dimension (f32 statistics, biased variance).
    mean = jnp.mean(acc, axis=-1, keepdims=True)
    yc = acc - mean
    var = jnp.mean(yc * yc, axis=-1, keepdims=True)
    out = yc * jax.lax.rsqrt(var + eps) * gamma_ref[...] + beta_ref[...]

    o_ref[0] = out.astype(o_ref.dtype)


def self_attention_block(x, params, *, num_heads, eps=1e-5):
    """x: (B, S, E) (or (B, E), like the PyTorch module).  params: MHA + LayerNorm params."""
    if x.ndim == 2:
        # Matches the PyTorch module: unsqueeze a length-1 sequence dim, then squeeze.
        return self_attention_block(x[:, None, :], params,
                                    num_heads=num_heads, eps=eps)[:, 0, :]

    B, S, E = x.shape
    head_dim = E // num_heads
    assert head_dim * num_heads == E

    # PyTorch nn.MultiheadAttention: F.linear(x, W) = x @ W^T.  Pre-transpose and
    # fuse the q/k/v projections into one (E, 3E) weight / (1, 3E) bias, folding
    # the 1/sqrt(head_dim) softmax scale into the q columns.
    scale = 1.0 / math.sqrt(head_dim)
    wqkv_t = jnp.concatenate(
        [params["wq"].T * scale, params["wk"].T, params["wv"].T], axis=1)    # (E, 3E)
    bqkv = jnp.concatenate(
        [params["bq"] * scale, params["bk"], params["bv"]]).reshape(1, 3 * E)

    # Output projection split into per-head (Dh, E) row blocks so the kernel can
    # accumulate attn_out head by head: wo_heads[h] = Wo^T[h*Dh:(h+1)*Dh, :].
    wo_heads = params["wo"].T.reshape(num_heads, head_dim, E)
    bo = params["bo"].reshape(1, E)
    gamma = params["gamma"].reshape(1, E)
    beta = params["beta"].reshape(1, E)

    kernel = functools.partial(_attn_block_kernel,
                               num_heads=num_heads,
                               head_dim=head_dim,
                               eps=eps)

    def replicated(shape):
        return pl.BlockSpec(shape, lambda b, _n=len(shape): (0,) * _n)

    return pl.pallas_call(
        kernel,
        out_shape=jax.ShapeDtypeStruct((B, S, E), x.dtype),
        grid=(B,),
        in_specs=[
            pl.BlockSpec((1, S, E), lambda b: (b, 0, 0)),    # x, one batch element / step
            replicated((E, 3 * E)),                          # fused Wqkv^T (q pre-scaled)
            replicated((1, 3 * E)),                          # fused bqkv
            replicated((num_heads, head_dim, E)),            # Wo^T split per head
            replicated((1, E)),                              # bo
            replicated((1, E)), replicated((1, E)),          # gamma, beta
        ],
        out_specs=pl.BlockSpec((1, S, E), lambda b: (b, 0, 0)),
        compiler_params=pltpu.CompilerParams(
            dimension_semantics=("parallel",)),              # B >= 2 keeps both v7x TCs busy
    )(x, wqkv_t, bqkv, wo_heads, bo, gamma, beta)


def make_params(key, embed_dim):
    """Deterministic synthetic parameters matching nn.MultiheadAttention + LayerNorm."""
    E = embed_dim
    ks = jax.random.split(key, 5)
    scale = 0.02
    in_proj_w = scale * jax.random.normal(ks[0], (3 * E, E), jnp.float32)
    in_proj_b = scale * jax.random.normal(ks[1], (3 * E,), jnp.float32)
    out_proj_w = scale * jax.random.normal(ks[2], (E, E), jnp.float32)
    out_proj_b = scale * jax.random.normal(ks[3], (E,), jnp.float32)
    return {
        "wq": in_proj_w[0:E],
        "wk": in_proj_w[E:2 * E],
        "wv": in_proj_w[2 * E:3 * E],
        "bq": in_proj_b[0:E],
        "bk": in_proj_b[E:2 * E],
        "bv": in_proj_b[2 * E:3 * E],
        "wo": out_proj_w,
        "bo": out_proj_b,
        "gamma": jnp.ones((E,), jnp.float32),
        "beta": jnp.zeros((E,), jnp.float32),
    }


def reference(x, params, num_heads, eps=1e-5):
    """Pure-JAX reference of the PyTorch forward (eval mode)."""
    B, S, E = x.shape
    Dh = E // num_heads
    q = x @ params["wq"].T + params["bq"]
    k = x @ params["wk"].T + params["bk"]
    v = x @ params["wv"].T + params["bv"]
    qh = q.reshape(B, S, num_heads, Dh).transpose(0, 2, 1, 3)
    kh = k.reshape(B, S, num_heads, Dh).transpose(0, 2, 1, 3)
    vh = v.reshape(B, S, num_heads, Dh).transpose(0, 2, 1, 3)
    scores = jnp.einsum("bhqd,bhkd->bhqk", qh, kh) / math.sqrt(Dh)
    p = jax.nn.softmax(scores, axis=-1)
    o = jnp.einsum("bhqk,bhkd->bhqd", p, vh).transpose(0, 2, 1, 3).reshape(B, S, E)
    attn_out = o @ params["wo"].T + params["bo"]
    y = x + attn_out
    mean = jnp.mean(y, -1, keepdims=True)
    var = jnp.mean((y - mean) ** 2, -1, keepdims=True)
    return (y - mean) / jnp.sqrt(var + eps) * params["gamma"] + params["beta"]


if __name__ == "__main__":
    B, S, E, H = 2, 8, 32, 8

    key = jax.random.PRNGKey(0)
    x = jax.random.normal(key, (B, S, E), jnp.float32)
    params = make_params(jax.random.PRNGKey(42), E)

    out = jax.block_until_ready(self_attention_block(x, params, num_heads=H))

    ref = reference(x, params, H)
    assert out.shape == (B, S, E)
    max_err = jnp.max(jnp.abs(out - ref))
    # Tolerance slightly looser than 1e-4 because the softmax denominator uses
    # the EUP approximate reciprocal.
    assert jnp.allclose(out, ref, atol=1e-3, rtol=1e-3), f"max abs err = {max_err}"

    print("KERNEL_OK")
</pallas_src>

<mosaic_0001>
module attributes {stable_mosaic.version = 11 : i64} {
  func.func @_attn_block_kernel(%arg0: i32, %arg1: memref<1x8x32xf32, #tpu.memory_space<vmem>>, %arg2: memref<32x96xf32, #tpu.memory_space<vmem>>, %arg3: memref<1x96xf32, #tpu.memory_space<vmem>>, %arg4: memref<8x4x32xf32, #tpu.memory_space<vmem>>, %arg5: memref<1x32xf32, #tpu.memory_space<vmem>>, %arg6: memref<1x32xf32, #tpu.memory_space<vmem>>, %arg7: memref<1x32xf32, #tpu.memory_space<vmem>>, %arg8: memref<1x8x32xf32, #tpu.memory_space<vmem>>) attributes {dimension_semantics = [#tpu.dimension_semantics<parallel>], iteration_bounds = array<i64: 2>, scalar_prefetch = 0 : i64, scratch_operands = 0 : i64, tpu.core_type = #tpu.core_type<tc>, window_params = [{transform_indices = @transform_0, window_bounds = array<i64: 1, 8, 32>}, {pipeline_mode = #tpu.pipeline_mode<synchronous>, transform_indices = @transform_1, window_bounds = array<i64: 32, 96>}, {pipeline_mode = #tpu.pipeline_mode<synchronous>, transform_indices = @transform_2, window_bounds = array<i64: 1, 96>}, {pipeline_mode = #tpu.pipeline_mode<synchronous>, transform_indices = @transform_3, window_bounds = array<i64: 8, 4, 32>}, {pipeline_mode = #tpu.pipeline_mode<synchronous>, transform_indices = @transform_4, window_bounds = array<i64: 1, 32>}, {pipeline_mode = #tpu.pipeline_mode<synchronous>, transform_indices = @transform_5, window_bounds = array<i64: 1, 32>}, {pipeline_mode = #tpu.pipeline_mode<synchronous>, transform_indices = @transform_6, window_bounds = array<i64: 1, 32>}, {transform_indices = @transform_7, window_bounds = array<i64: 1, 8, 32>}]} {
    %c0 = arith.constant 0 : index
    %c0_0 = arith.constant 0 : index
    %c0_1 = arith.constant 0 : index
    %0 = vector.load %arg1[%c0, %c0_0, %c0_1] : memref<1x8x32xf32, #tpu.memory_space<vmem>>, vector<1x8x32xf32>
    %1 = vector.shape_cast %0 : vector<1x8x32xf32> to vector<8x32xf32>
    %c0_2 = arith.constant 0 : index
    %c0_3 = arith.constant 0 : index
    %2 = vector.load %arg2[%c0_2, %c0_3] : memref<32x96xf32, #tpu.memory_space<vmem>>, vector<32x96xf32>
    %cst = arith.constant dense<0.000000e+00> : vector<8x96xf32>
    %3 = tpu.matmul %1, %2, %cst {dimension_numbers = #tpu.dot_dimension_numbers<[1], [0], [0], [1], [0, 0, 1, 1], [], []>} : vector<8x32xf32>, vector<32x96xf32>, vector<8x96xf32> -> vector<8x96xf32>
    %c0_4 = arith.constant 0 : index
    %c0_5 = arith.constant 0 : index
    %4 = vector.load %arg3[%c0_4, %c0_5] : memref<1x96xf32, #tpu.memory_space<vmem>>, vector<1x96xf32>
    %5 = vector.broadcast %4 : vector<1x96xf32> to vector<8x96xf32>
    %6 = arith.addf %3, %5 : vector<8x96xf32>
    %c0_6 = arith.constant 0 : index
    %c0_7 = arith.constant 0 : index
    %7 = vector.load %arg5[%c0_6, %c0_7] : memref<1x32xf32, #tpu.memory_space<vmem>>, vector<1x32xf32>
    %8 = vector.broadcast %7 : vector<1x32xf32> to vector<8x32xf32>
    %9 = arith.addf %1, %8 : vector<8x32xf32>
    %10 = vector.extract_strided_slice %6 {offsets = [0, 0], sizes = [8, 4], strides = [1, 1]} : vector<8x96xf32> to vector<8x4xf32>
    %11 = vector.extract_strided_slice %6 {offsets = [0, 32], sizes = [8, 4], strides = [1, 1]} : vector<8x96xf32> to vector<8x4xf32>
    %12 = vector.extract_strided_slice %6 {offsets = [0, 64], sizes = [8, 4], strides = [1, 1]} : vector<8x96xf32> to vector<8x4xf32>
    %cst_8 = arith.constant dense<0.000000e+00> : vector<8x8xf32>
    %13 = tpu.matmul %10, %11, %cst_8 {dimension_numbers = #tpu.dot_dimension_numbers<[1], [1], [0], [0], [0, 0, 1, 0], [], []>} : vector<8x4xf32>, vector<8x4xf32>, vector<8x8xf32> -> vector<8x8xf32>
    %cst_9 = arith.constant dense<0xFF800000> : vector<8xf32>
    %14 = vector.multi_reduction <maximumf>, %13, %cst_9 [1] : vector<8x8xf32> to vector<8xf32>
    %15 = vector.shape_cast %14 : vector<8xf32> to vector<8x1xf32>
    %16 = vector.broadcast %15 : vector<8x1xf32> to vector<8x8xf32>
    %17 = arith.subf %13, %16 : vector<8x8xf32>
    %18 = math.exp %17 : vector<8x8xf32>
    %cst_10 = arith.constant dense<0.000000e+00> : vector<8xf32>
    %19 = vector.multi_reduction <add>, %18, %cst_10 [1] : vector<8x8xf32> to vector<8xf32>
    %20 = vector.shape_cast %19 : vector<8xf32> to vector<8x1xf32>
    %cst_11 = arith.constant dense<0.000000e+00> : vector<8x4xf32>
    %21 = tpu.matmul %18, %12, %cst_11 {dimension_numbers = #tpu.dot_dimension_numbers<[1], [0], [0], [1], [0, 0, 1, 1], [], []>} : vector<8x8xf32>, vector<8x4xf32>, vector<8x4xf32> -> vector<8x4xf32>
    %22 = tpu.reciprocal %20 {approx = true} : vector<8x1xf32> -> vector<8x1xf32>
    %23 = vector.broadcast %22 : vector<8x1xf32> to vector<8x4xf32>
    %24 = arith.mulf %21, %23 : vector<8x4xf32>
    %c0_12 = arith.constant 0 : index
    %c0_13 = arith.constant 0 : index
    %c0_14 = arith.constant 0 : index
    %25 = vector.load %arg4[%c0_12, %c0_13, %c0_14] : memref<8x4x32xf32, #tpu.memory_space<vmem>>, vector<1x4x32xf32>
    %26 = vector.shape_cast %25 : vector<1x4x32xf32> to vector<4x32xf32>
    %cst_15 = arith.constant dense<0.000000e+00> : vector<8x32xf32>
    %27 = tpu.matmul %24, %26, %cst_15 {dimension_numbers = #tpu.dot_dimension_numbers<[1], [0], [0], [1], [0, 0, 1, 1], [], []>} : vector<8x4xf32>, vector<4x32xf32>, vector<8x32xf32> -> vector<8x32xf32>
    %28 = arith.addf %9, %27 : vector<8x32xf32>
    %29 = vector.extract_strided_slice %6 {offsets = [0, 4], sizes = [8, 4], strides = [1, 1]} : vector<8x96xf32> to vector<8x4xf32>
    %30 = vector.extract_strided_slice %6 {offsets = [0, 36], sizes = [8, 4], strides = [1, 1]} : vector<8x96xf32> to vector<8x4xf32>
    %31 = vector.extract_strided_slice %6 {offsets = [0, 68], sizes = [8, 4], strides = [1, 1]} : vector<8x96xf32> to vector<8x4xf32>
    %cst_16 = arith.constant dense<0.000000e+00> : vector<8x8xf32>
    %32 = tpu.matmul %29, %30, %cst_16 {dimension_numbers = #tpu.dot_dimension_numbers<[1], [1], [0], [0], [0, 0, 1, 0], [], []>} : vector<8x4xf32>, vector<8x4xf32>, vector<8x8xf32> -> vector<8x8xf32>
    %cst_17 = arith.constant dense<0xFF800000> : vector<8xf32>
    %33 = vector.multi_reduction <maximumf>, %32, %cst_17 [1] : vector<8x8xf32> to vector<8xf32>
    %34 = vector.shape_cast %33 : vector<8xf32> to vector<8x1xf32>
    %35 = vector.broadcast %34 : vector<8x1xf32> to vector<8x8xf32>
    %36 = arith.subf %32, %35 : vector<8x8xf32>
    %37 = math.exp %36 : vector<8x8xf32>
    %cst_18 = arith.constant dense<0.000000e+00> : vector<8xf32>
    %38 = vector.multi_reduction <add>, %37, %cst_18 [1] : vector<8x8xf32> to vector<8xf32>
    %39 = vector.shape_cast %38 : vector<8xf32> to vector<8x1xf32>
    %cst_19 = arith.constant dense<0.000000e+00> : vector<8x4xf32>
    %40 = tpu.matmul %37, %31, %cst_19 {dimension_numbers = #tpu.dot_dimension_numbers<[1], [0], [0], [1], [0, 0, 1, 1], [], []>} : vector<8x8xf32>, vector<8x4xf32>, vector<8x4xf32> -> vector<8x4xf32>
    %41 = tpu.reciprocal %39 {approx = true} : vector<8x1xf32> -> vector<8x1xf32>
    %42 = vector.broadcast %41 : vector<8x1xf32> to vector<8x4xf32>
    %43 = arith.mulf %40, %42 : vector<8x4xf32>
    %c1 = arith.constant 1 : index
    %c0_20 = arith.constant 0 : index
    %c0_21 = arith.constant 0 : index
    %44 = vector.load %arg4[%c1, %c0_20, %c0_21] : memref<8x4x32xf32, #tpu.memory_space<vmem>>, vector<1x4x32xf32>
    %45 = vector.shape_cast %44 : vector<1x4x32xf32> to vector<4x32xf32>
    %cst_22 = arith.constant dense<0.000000e+00> : vector<8x32xf32>
    %46 = tpu.matmul %43, %45, %cst_22 {dimension_numbers = #tpu.dot_dimension_numbers<[1], [0], [0], [1], [0, 0, 1, 1], [], []>} : vector<8x4xf32>, vector<4x32xf32>, vector<8x32xf32> -> vector<8x32xf32>
    %47 = arith.addf %28, %46 : vector<8x32xf32>
    %48 = vector.extract_strided_slice %6 {offsets = [0, 8], sizes = [8, 4], strides = [1, 1]} : vector<8x96xf32> to vector<8x4xf32>
    %49 = vector.extract_strided_slice %6 {offsets = [0, 40], sizes = [8, 4], strides = [1, 1]} : vector<8x96xf32> to vector<8x4xf32>
    %50 = vector.extract_strided_slice %6 {offsets = [0, 72], sizes = [8, 4], strides = [1, 1]} : vector<8x96xf32> to vector<8x4xf32>
    %cst_23 = arith.constant dense<0.000000e+00> : vector<8x8xf32>
    %51 = tpu.matmul %48, %49, %cst_23 {dimension_numbers = #tpu.dot_dimension_numbers<[1], [1], [0], [0], [0, 0, 1, 0], [], []>} : vector<8x4xf32>, vector<8x4xf32>, vector<8x8xf32> -> vector<8x8xf32>
    %cst_24 = arith.constant dense<0xFF800000> : vector<8xf32>
    %52 = vector.multi_reduction <maximumf>, %51, %cst_24 [1] : vector<8x8xf32> to vector<8xf32>
    %53 = vector.shape_cast %52 : vector<8xf32> to vector<8x1xf32>
    %54 = vector.broadcast %53 : vector<8x1xf32> to vector<8x8xf32>
    %55 = arith.subf %51, %54 : vector<8x8xf32>
    %56 = math.exp %55 : vector<8x8xf32>
    %cst_25 = arith.constant dense<0.000000e+00> : vector<8xf32>
    %57 = vector.multi_reduction <add>, %56, %cst_25 [1] : vector<8x8xf32> to vector<8xf32>
    %58 = vector.shape_cast %57 : vector<8xf32> to vector<8x1xf32>
    %cst_26 = arith.constant dense<0.000000e+00> : vector<8x4xf32>
    %59 = tpu.matmul %56, %50, %cst_26 {dimension_numbers = #tpu.dot_dimension_numbers<[1], [0], [0], [1], [0, 0, 1, 1], [], []>} : vector<8x8xf32>, vector<8x4xf32>, vector<8x4xf32> -> vector<8x4xf32>
    %60 = tpu.reciprocal %58 {approx = true} : vector<8x1xf32> -> vector<8x1xf32>
    %61 = vector.broadcast %60 : vector<8x1xf32> to vector<8x4xf32>
    %62 = arith.mulf %59, %61 : vector<8x4xf32>
    %c2 = arith.constant 2 : index
    %c0_27 = arith.constant 0 : index
    %c0_28 = arith.constant 0 : index
    %63 = vector.load %arg4[%c2, %c0_27, %c0_28] : memref<8x4x32xf32, #tpu.memory_space<vmem>>, vector<1x4x32xf32>
    %64 = vector.shape_cast %63 : vector<1x4x32xf32> to vector<4x32xf32>
    %cst_29 = arith.constant dense<0.000000e+00> : vector<8x32xf32>
    %65 = tpu.matmul %62, %64, %cst_29 {dimension_numbers = #tpu.dot_dimension_numbers<[1], [0], [0], [1], [0, 0, 1, 1], [], []>} : vector<8x4xf32>, vector<4x32xf32>, vector<8x32xf32> -> vector<8x32xf32>
    %66 = arith.addf %47, %65 : vector<8x32xf32>
    %67 = vector.extract_strided_slice %6 {offsets = [0, 12], sizes = [8, 4], strides = [1, 1]} : vector<8x96xf32> to vector<8x4xf32>
    %68 = vector.extract_strided_slice %6 {offsets = [0, 44], sizes = [8, 4], strides = [1, 1]} : vector<8x96xf32> to vector<8x4xf32>
    %69 = vector.extract_strided_slice %6 {offsets = [0, 76], sizes = [8, 4], strides = [1, 1]} : vector<8x96xf32> to vector<8x4xf32>
    %cst_30 = arith.constant dense<0.000000e+00> : vector<8x8xf32>
    %70 = tpu.matmul %67, %68, %cst_30 {dimension_numbers = #tpu.dot_dimension_numbers<[1], [1], [0], [0], [0, 0, 1, 0], [], []>} : vector<8x4xf32>, vector<8x4xf32>, vector<8x8xf32> -> vector<8x8xf32>
    %cst_31 = arith.constant dense<0xFF800000> : vector<8xf32>
    %71 = vector.multi_reduction <maximumf>, %70, %cst_31 [1] : vector<8x8xf32> to vector<8xf32>
    %72 = vector.shape_cast %71 : vector<8xf32> to vector<8x1xf32>
    %73 = vector.broadcast %72 : vector<8x1xf32> to vector<8x8xf32>
    %74 = arith.subf %70, %73 : vector<8x8xf32>
    %75 = math.exp %74 : vector<8x8xf32>
    %cst_32 = arith.constant dense<0.000000e+00> : vector<8xf32>
    %76 = vector.multi_reduction <add>, %75, %cst_32 [1] : vector<8x8xf32> to vector<8xf32>
    %77 = vector.shape_cast %76 : vector<8xf32> to vector<8x1xf32>
    %cst_33 = arith.constant dense<0.000000e+00> : vector<8x4xf32>
    %78 = tpu.matmul %75, %69, %cst_33 {dimension_numbers = #tpu.dot_dimension_numbers<[1], [0], [0], [1], [0, 0, 1, 1], [], []>} : vector<8x8xf32>, vector<8x4xf32>, vector<8x4xf32> -> vector<8x4xf32>
    %79 = tpu.reciprocal %77 {approx = true} : vector<8x1xf32> -> vector<8x1xf32>
    %80 = vector.broadcast %79 : vector<8x1xf32> to vector<8x4xf32>
    %81 = arith.mulf %78, %80 : vector<8x4xf32>
    %c3 = arith.constant 3 : index
    %c0_34 = arith.constant 0 : index
    %c0_35 = arith.constant 0 : index
    %82 = vector.load %arg4[%c3, %c0_34, %c0_35] : memref<8x4x32xf32, #tpu.memory_space<vmem>>, vector<1x4x32xf32>
    %83 = vector.shape_cast %82 : vector<1x4x32xf32> to vector<4x32xf32>
    %cst_36 = arith.constant dense<0.000000e+00> : vector<8x32xf32>
    %84 = tpu.matmul %81, %83, %cst_36 {dimension_numbers = #tpu.dot_dimension_numbers<[1], [0], [0], [1], [0, 0, 1, 1], [], []>} : vector<8x4xf32>, vector<4x32xf32>, vector<8x32xf32> -> vector<8x32xf32>
    %85 = arith.addf %66, %84 : vector<8x32xf32>
    %86 = vector.extract_strided_slice %6 {offsets = [0, 16], sizes = [8, 4], strides = [1, 1]} : vector<8x96xf32> to vector<8x4xf32>
    %87 = vector.extract_strided_slice %6 {offsets = [0, 48], sizes = [8, 4], strides = [1, 1]} : vector<8x96xf32> to vector<8x4xf32>
    %88 = vector.extract_strided_slice %6 {offsets = [0, 80], sizes = [8, 4], strides = [1, 1]} : vector<8x96xf32> to vector<8x4xf32>
    %cst_37 = arith.constant dense<0.000000e+00> : vector<8x8xf32>
    %89 = tpu.matmul %86, %87, %cst_37 {dimension_numbers = #tpu.dot_dimension_numbers<[1], [1], [0], [0], [0, 0, 1, 0], [], []>} : vector<8x4xf32>, vector<8x4xf32>, vector<8x8xf32> -> vector<8x8xf32>
    %cst_38 = arith.constant dense<0xFF800000> : vector<8xf32>
    %90 = vector.multi_reduction <maximumf>, %89, %cst_38 [1] : vector<8x8xf32> to vector<8xf32>
    %91 = vector.shape_cast %90 : vector<8xf32> to vector<8x1xf32>
    %92 = vector.broadcast %91 : vector<8x1xf32> to vector<8x8xf32>
    %93 = arith.subf %89, %92 : vector<8x8xf32>
    %94 = math.exp %93 : vector<8x8xf32>
    %cst_39 = arith.constant dense<0.000000e+00> : vector<8xf32>
    %95 = vector.multi_reduction <add>, %94, %cst_39 [1] : vector<8x8xf32> to vector<8xf32>
    %96 = vector.shape_cast %95 : vector<8xf32> to vector<8x1xf32>
    %cst_40 = arith.constant dense<0.000000e+00> : vector<8x4xf32>
    %97 = tpu.matmul %94, %88, %cst_40 {dimension_numbers = #tpu.dot_dimension_numbers<[1], [0], [0], [1], [0, 0, 1, 1], [], []>} : vector<8x8xf32>, vector<8x4xf32>, vector<8x4xf32> -> vector<8x4xf32>
    %98 = tpu.reciprocal %96 {approx = true} : vector<8x1xf32> -> vector<8x1xf32>
    %99 = vector.broadcast %98 : vector<8x1xf32> to vector<8x4xf32>
    %100 = arith.mulf %97, %99 : vector<8x4xf32>
    %c4 = arith.constant 4 : index
    %c0_41 = arith.constant 0 : index
    %c0_42 = arith.constant 0 : index
    %101 = vector.load %arg4[%c4, %c0_41, %c0_42] : memref<8x4x32xf32, #tpu.memory_space<vmem>>, vector<1x4x32xf32>
    %102 = vector.shape_cast %101 : vector<1x4x32xf32> to vector<4x32xf32>
    %cst_43 = arith.constant dense<0.000000e+00> : vector<8x32xf32>
    %103 = tpu.matmul %100, %102, %cst_43 {dimension_numbers = #tpu.dot_dimension_numbers<[1], [0], [0], [1], [0, 0, 1, 1], [], []>} : vector<8x4xf32>, vector<4x32xf32>, vector<8x32xf32> -> vector<8x32xf32>
    %104 = arith.addf %85, %103 : vector<8x32xf32>
    %105 = vector.extract_strided_slice %6 {offsets = [0, 20], sizes = [8, 4], strides = [1, 1]} : vector<8x96xf32> to vector<8x4xf32>
    %106 = vector.extract_strided_slice %6 {offsets = [0, 52], sizes = [8, 4], strides = [1, 1]} : vector<8x96xf32> to vector<8x4xf32>
    %107 = vector.extract_strided_slice %6 {offsets = [0, 84], sizes = [8, 4], strides = [1, 1]} : vector<8x96xf32> to vector<8x4xf32>
    %cst_44 = arith.constant dense<0.000000e+00> : vector<8x8xf32>
    %108 = tpu.matmul %105, %106, %cst_44 {dimension_numbers = #tpu.dot_dimension_numbers<[1], [1], [0], [0], [0, 0, 1, 0], [], []>} : vector<8x4xf32>, vector<8x4xf32>, vector<8x8xf32> -> vector<8x8xf32>
    %cst_45 = arith.constant dense<0xFF800000> : vector<8xf32>
    %109 = vector.multi_reduction <maximumf>, %108, %cst_45 [1] : vector<8x8xf32> to vector<8xf32>
    %110 = vector.shape_cast %109 : vector<8xf32> to vector<8x1xf32>
    %111 = vector.broadcast %110 : vector<8x1xf32> to vector<8x8xf32>
    %112 = arith.subf %108, %111 : vector<8x8xf32>
    %113 = math.exp %112 : vector<8x8xf32>
    %cst_46 = arith.constant dense<0.000000e+00> : vector<8xf32>
    %114 = vector.multi_reduction <add>, %113, %cst_46 [1] : vector<8x8xf32> to vector<8xf32>
    %115 = vector.shape_cast %114 : vector<8xf32> to vector<8x1xf32>
    %cst_47 = arith.constant dense<0.000000e+00> : vector<8x4xf32>
    %116 = tpu.matmul %113, %107, %cst_47 {dimension_numbers = #tpu.dot_dimension_numbers<[1], [0], [0], [1], [0, 0, 1, 1], [], []>} : vector<8x8xf32>, vector<8x4xf32>, vector<8x4xf32> -> vector<8x4xf32>
    %117 = tpu.reciprocal %115 {approx = true} : vector<8x1xf32> -> vector<8x1xf32>
    %118 = vector.broadcast %117 : vector<8x1xf32> to vector<8x4xf32>
    %119 = arith.mulf %116, %118 : vector<8x4xf32>
    %c5 = arith.constant 5 : index
    %c0_48 = arith.constant 0 : index
    %c0_49 = arith.constant 0 : index
    %120 = vector.load %arg4[%c5, %c0_48, %c0_49] : memref<8x4x32xf32, #tpu.memory_space<vmem>>, vector<1x4x32xf32>
    %121 = vector.shape_cast %120 : vector<1x4x32xf32> to vector<4x32xf32>
    %cst_50 = arith.constant dense<0.000000e+00> : vector<8x32xf32>
    %122 = tpu.matmul %119, %121, %cst_50 {dimension_numbers = #tpu.dot_dimension_numbers<[1], [0], [0], [1], [0, 0, 1, 1], [], []>} : vector<8x4xf32>, vector<4x32xf32>, vector<8x32xf32> -> vector<8x32xf32>
    %123 = arith.addf %104, %122 : vector<8x32xf32>
    %124 = vector.extract_strided_slice %6 {offsets = [0, 24], sizes = [8, 4], strides = [1, 1]} : vector<8x96xf32> to vector<8x4xf32>
    %125 = vector.extract_strided_slice %6 {offsets = [0, 56], sizes = [8, 4], strides = [1, 1]} : vector<8x96xf32> to vector<8x4xf32>
    %126 = vector.extract_strided_slice %6 {offsets = [0, 88], sizes = [8, 4], strides = [1, 1]} : vector<8x96xf32> to vector<8x4xf32>
    %cst_51 = arith.constant dense<0.000000e+00> : vector<8x8xf32>
    %127 = tpu.matmul %124, %125, %cst_51 {dimension_numbers = #tpu.dot_dimension_numbers<[1], [1], [0], [0], [0, 0, 1, 0], [], []>} : vector<8x4xf32>, vector<8x4xf32>, vector<8x8xf32> -> vector<8x8xf32>
    %cst_52 = arith.constant dense<0xFF800000> : vector<8xf32>
    %128 = vector.multi_reduction <maximumf>, %127, %cst_52 [1] : vector<8x8xf32> to vector<8xf32>
    %129 = vector.shape_cast %128 : vector<8xf32> to vector<8x1xf32>
    %130 = vector.broadcast %129 : vector<8x1xf32> to vector<8x8xf32>
    %131 = arith.subf %127, %130 : vector<8x8xf32>
    %132 = math.exp %131 : vector<8x8xf32>
    %cst_53 = arith.constant dense<0.000000e+00> : vector<8xf32>
    %133 = vector.multi_reduction <add>, %132, %cst_53 [1] : vector<8x8xf32> to vector<8xf32>
    %134 = vector.shape_cast %133 : vector<8xf32> to vector<8x1xf32>
    %cst_54 = arith.constant dense<0.000000e+00> : vector<8x4xf32>
    %135 = tpu.matmul %132, %126, %cst_54 {dimension_numbers = #tpu.dot_dimension_numbers<[1], [0], [0], [1], [0, 0, 1, 1], [], []>} : vector<8x8xf32>, vector<8x4xf32>, vector<8x4xf32> -> vector<8x4xf32>
    %136 = tpu.reciprocal %134 {approx = true} : vector<8x1xf32> -> vector<8x1xf32>
    %137 = vector.broadcast %136 : vector<8x1xf32> to vector<8x4xf32>
    %138 = arith.mulf %135, %137 : vector<8x4xf32>
    %c6 = arith.constant 6 : index
    %c0_55 = arith.constant 0 : index
    %c0_56 = arith.constant 0 : index
    %139 = vector.load %arg4[%c6, %c0_55, %c0_56] : memref<8x4x32xf32, #tpu.memory_space<vmem>>, vector<1x4x32xf32>
    %140 = vector.shape_cast %139 : vector<1x4x32xf32> to vector<4x32xf32>
    %cst_57 = arith.constant dense<0.000000e+00> : vector<8x32xf32>
    %141 = tpu.matmul %138, %140, %cst_57 {dimension_numbers = #tpu.dot_dimension_numbers<[1], [0], [0], [1], [0, 0, 1, 1], [], []>} : vector<8x4xf32>, vector<4x32xf32>, vector<8x32xf32> -> vector<8x32xf32>
    %142 = arith.addf %123, %141 : vector<8x32xf32>
    %143 = vector.extract_strided_slice %6 {offsets = [0, 28], sizes = [8, 4], strides = [1, 1]} : vector<8x96xf32> to vector<8x4xf32>
    %144 = vector.extract_strided_slice %6 {offsets = [0, 60], sizes = [8, 4], strides = [1, 1]} : vector<8x96xf32> to vector<8x4xf32>
    %145 = vector.extract_strided_slice %6 {offsets = [0, 92], sizes = [8, 4], strides = [1, 1]} : vector<8x96xf32> to vector<8x4xf32>
    %cst_58 = arith.constant dense<0.000000e+00> : vector<8x8xf32>
    %146 = tpu.matmul %143, %144, %cst_58 {dimension_numbers = #tpu.dot_dimension_numbers<[1], [1], [0], [0], [0, 0, 1, 0], [], []>} : vector<8x4xf32>, vector<8x4xf32>, vector<8x8xf32> -> vector<8x8xf32>
    %cst_59 = arith.constant dense<0xFF800000> : vector<8xf32>
    %147 = vector.multi_reduction <maximumf>, %146, %cst_59 [1] : vector<8x8xf32> to vector<8xf32>
    %148 = vector.shape_cast %147 : vector<8xf32> to vector<8x1xf32>
    %149 = vector.broadcast %148 : vector<8x1xf32> to vector<8x8xf32>
    %150 = arith.subf %146, %149 : vector<8x8xf32>
    %151 = math.exp %150 : vector<8x8xf32>
    %cst_60 = arith.constant dense<0.000000e+00> : vector<8xf32>
    %152 = vector.multi_reduction <add>, %151, %cst_60 [1] : vector<8x8xf32> to vector<8xf32>
    %153 = vector.shape_cast %152 : vector<8xf32> to vector<8x1xf32>
    %cst_61 = arith.constant dense<0.000000e+00> : vector<8x4xf32>
    %154 = tpu.matmul %151, %145, %cst_61 {dimension_numbers = #tpu.dot_dimension_numbers<[1], [0], [0], [1], [0, 0, 1, 1], [], []>} : vector<8x8xf32>, vector<8x4xf32>, vector<8x4xf32> -> vector<8x4xf32>
    %155 = tpu.reciprocal %153 {approx = true} : vector<8x1xf32> -> vector<8x1xf32>
    %156 = vector.broadcast %155 : vector<8x1xf32> to vector<8x4xf32>
    %157 = arith.mulf %154, %156 : vector<8x4xf32>
    %c7 = arith.constant 7 : index
    %c0_62 = arith.constant 0 : index
    %c0_63 = arith.constant 0 : index
    %158 = vector.load %arg4[%c7, %c0_62, %c0_63] : memref<8x4x32xf32, #tpu.memory_space<vmem>>, vector<1x4x32xf32>
    %159 = vector.shape_cast %158 : vector<1x4x32xf32> to vector<4x32xf32>
    %cst_64 = arith.constant dense<0.000000e+00> : vector<8x32xf32>
    %160 = tpu.matmul %157, %159, %cst_64 {dimension_numbers = #tpu.dot_dimension_numbers<[1], [0], [0], [1], [0, 0, 1, 1], [], []>} : vector<8x4xf32>, vector<4x32xf32>, vector<8x32xf32> -> vector<8x32xf32>
    %161 = arith.addf %142, %160 : vector<8x32xf32>
    %cst_65 = arith.constant dense<0.000000e+00> : vector<8xf32>
    %162 = vector.multi_reduction <add>, %161, %cst_65 [1] : vector<8x32xf32> to vector<8xf32>
    %163 = vector.shape_cast %162 : vector<8xf32> to vector<8x1xf32>
    %cst_66 = arith.constant 3.200000e+01 : f32
    %164 = vector.broadcast %cst_66 : f32 to vector<8x1xf32>
    %165 = arith.divf %163, %164 : vector<8x1xf32>
    %166 = vector.broadcast %165 : vector<8x1xf32> to vector<8x32xf32>
    %167 = arith.subf %161, %166 : vector<8x32xf32>
    %168 = arith.mulf %167, %167 : vector<8x32xf32>
    %cst_67 = arith.constant dense<0.000000e+00> : vector<8xf32>
    %169 = vector.multi_reduction <add>, %168, %cst_67 [1] : vector<8x32xf32> to vector<8xf32>
    %170 = vector.shape_cast %169 : vector<8xf32> to vector<8x1xf32>
    %cst_68 = arith.constant 3.200000e+01 : f32
    %171 = vector.broadcast %cst_68 : f32 to vector<8x1xf32>
    %172 = arith.divf %170, %171 : vector<8x1xf32>
    %cst_69 = arith.constant 9.99999974E-6 : f32
    %173 = vector.broadcast %cst_69 : f32 to vector<8x1xf32>
    %174 = arith.addf %172, %173 : vector<8x1xf32>
    %175 = math.rsqrt %174 : vector<8x1xf32>
    %176 = vector.broadcast %175 : vector<8x1xf32> to vector<8x32xf32>
    %177 = arith.mulf %167, %176 : vector<8x32xf32>
    %c0_70 = arith.constant 0 : index
    %c0_71 = arith.constant 0 : index
    %178 = vector.load %arg6[%c0_70, %c0_71] : memref<1x32xf32, #tpu.memory_space<vmem>>, vector<1x32xf32>
    %179 = vector.broadcast %178 : vector<1x32xf32> to vector<8x32xf32>
    %180 = arith.mulf %177, %179 : vector<8x32xf32>
    %c0_72 = arith.constant 0 : index
    %c0_73 = arith.constant 0 : index
    %181 = vector.load %arg7[%c0_72, %c0_73] : memref<1x32xf32, #tpu.memory_space<vmem>>, vector<1x32xf32>
    %182 = vector.broadcast %181 : vector<1x32xf32> to vector<8x32xf32>
    %183 = arith.addf %180, %182 : vector<8x32xf32>
    %c0_74 = arith.constant 0 : index
    %c0_75 = arith.constant 0 : index
    %c0_76 = arith.constant 0 : index
    %184 = vector.load %arg8[%c0_74, %c0_75, %c0_76] : memref<1x8x32xf32, #tpu.memory_space<vmem>>, vector<1x8x32xf32>
    %185 = vector.shape_cast %184 : vector<1x8x32xf32> to vector<8x32xf32>
    %186 = vector.shape_cast %183 : vector<8x32xf32> to vector<1x8x32xf32>
    tpu.vector_store %arg8[%c0_74, %c0_75, %c0_76], %186 {strides = array<i32>} : memref<1x8x32xf32, #tpu.memory_space<vmem>>, vector<1x8x32xf32>,
    return
  }
  func.func @transform_0(%arg0: i32) -> (i32, i32, i32) {
    %c0_i32 = arith.constant 0 : i32
    %c0_i32_0 = arith.constant 0 : i32
    %c0_i32_1 = arith.constant 0 : i32
    return %arg0, %c0_i32, %c0_i32_0 : i32, i32, i32
  }
  func.func @transform_1(%arg0: i32) -> (i32, i32) {
    %c0_i32 = arith.constant 0 : i32
    %c0_i32_0 = arith.constant 0 : i32
    %c0_i32_1 = arith.constant 0 : i32
    return %c0_i32, %c0_i32_0 : i32, i32
  }
  func.func @transform_2(%arg0: i32) -> (i32, i32) {
    %c0_i32 = arith.constant 0 : i32
    %c0_i32_0 = arith.constant 0 : i32
    %c0_i32_1 = arith.constant 0 : i32
    return %c0_i32, %c0_i32_0 : i32, i32
  }
  func.func @transform_3(%arg0: i32) -> (i32, i32, i32) {
    %c0_i32 = arith.constant 0 : i32
    %c0_i32_0 = arith.constant 0 : i32
    %c0_i32_1 = arith.constant 0 : i32
    %c0_i32_2 = arith.constant 0 : i32
    return %c0_i32, %c0_i32_0, %c0_i32_1 : i32, i32, i32
  }
  func.func @transform_4(%arg0: i32) -> (i32, i32) {
    %c0_i32 = arith.constant 0 : i32
    %c0_i32_0 = arith.constant 0 : i32
    %c0_i32_1 = arith.constant 0 : i32
    return %c0_i32, %c0_i32_0 : i32, i32
  }
  func.func @transform_5(%arg0: i32) -> (i32, i32) {
    %c0_i32 = arith.constant 0 : i32
    %c0_i32_0 = arith.constant 0 : i32
    %c0_i32_1 = arith.constant 0 : i32
    return %c0_i32, %c0_i32_0 : i32, i32
  }
  func.func @transform_6(%arg0: i32) -> (i32, i32) {
    %c0_i32 = arith.constant 0 : i32
    %c0_i32_0 = arith.constant 0 : i32
    %c0_i32_1 = arith.constant 0 : i32
    return %c0_i32, %c0_i32_0 : i32, i32
  }
  func.func @transform_7(%arg0: i32) -> (i32, i32, i32) {
    %c0_i32 = arith.constant 0 : i32
    %c0_i32_0 = arith.constant 0 : i32
    %c0_i32_1 = arith.constant 0 : i32
    return %arg0, %c0_i32, %c0_i32_0 : i32, i32, i32
  }
}

</mosaic_0001>

<llo_original>
// kernel: tpu_custom_call.1
$region0: #{tpu_custom_call.1}
  #allocation0 [shape = 'u32[]', space=smem, size = 0x4, offset = 0x4, fixed_abs, tag = 'smem constant byte address 0x4 - core index']
  #allocation1 [shape = 'u32[144,128]{1,0:T(1,128)}', space=vmem, size = 0x12000, scoped, tag = 'internal scratch']
  %s0 = inlined_call_operand.hbm [shape: f32[2,8,32], index: 0, kind: input, shape index: {}]
  %s1 = inlined_call_operand.hbm [shape: f32[32,96], index: 1, kind: input, shape index: {}]
  %s2 = inlined_call_operand.vmem [shape: f32[1,96], index: 2, kind: input, shape index: {}]
  %s3 = inlined_call_operand.hbm [shape: f32[8,4,32], index: 3, kind: input, shape index: {}]
  %s4 = inlined_call_operand.vmem [shape: f32[1,32], index: 4, kind: input, shape index: {}]
  %s5 = inlined_call_operand.vmem [shape: f32[1,32], index: 5, kind: input, shape index: {}]
  %s6 = inlined_call_operand.vmem [shape: f32[1,32], index: 6, kind: input, shape index: {}]
  %s7 = inlined_call_operand.hbm [shape: f32[2,8,32], index: 7, kind: output, shape index: {}]
  %s8 = sld [smem:[#allocation0]]
  $region73: #{tpu_custom_call.1} parent=0
    _
  %s10 = ssub.s32 1, %s8
  %s11 = scalar_select 0, %s10, %s8
  $region1: #{tpu_custom_call.1} parent=0
    #allocation2 [shape = 'u8[8192]{0}', space=vmem, size = 0x2000, scoped, tag = 'input window, operand 0']
    #allocation3 [shape = 's32[2]{0}', space=sflag, size = 0x8, scoped, tag = 'scoped memory for tpu_custom_call.1']
    #allocation4 [shape = 's32[2]{0}', space=sflag, size = 0x8, scoped, tag = 'scoped memory for tpu_custom_call.1']
    #allocation5 [shape = 'u8[16384]{0}', space=vmem, size = 0x4000, scoped, tag = 'input window, operand 1, single buffered']
    #allocation6 [shape = 's32[1]{0}', space=sflag, size = 0x4, scoped, tag = 'scoped memory for tpu_custom_call.1']
    #allocation7 [shape = 'u8[16384]{0}', space=vmem, size = 0x4000, scoped, tag = 'input window, operand 3, single buffered']
    #allocation8 [shape = 'u8[8192]{0}', space=vmem, size = 0x2000, scoped, tag = 'output window, operand 0']
    %12 = vsyncpa [#allocation3], 0
    %s13 = scalar_lea.sflag [#allocation3], 1
    %14 = vsyncpa %s13, 0
    %15 = vsyncpa [#allocation6], 0
    %16 = vsyncpa [#allocation4], 0
    %s17 = scalar_lea.sflag [#allocation4], 1
    %18 = vsyncpa %s17, 0
    loop: start=0, step=1, limit=4
    $region2: #{tpu_custom_call.1} parent=1 // loop_pre_header
      _
    $region3: #{tpu_custom_call.1} parent=1 // loop_header
      %s20 = sphi 0, %s24
      %p21 = scmp.ge.s32.totalorder %s20, 4
      %s30 = sphi 0, %s32
      %s33 = sphi 0, %s30
      %s34 = sphi 0, %s33
      %s50 = sphi 0, %s34
      %s54 = sphi 0, %s54
      %s56 = sphi 0, %s54
      %s57 = sphi 0, %s56
      %s71 = sphi 0, %s57
      %s75 = sphi 0, %s75
      %s77 = sphi 0, %s75
      %s78 = sphi 0, %s77
      %s92 = sphi 0, %s78
      %s96 = sphi 0, %s96
      %s98 = sphi 0, %s96
      %s99 = sphi 0, %s98
      %s113 = sphi 0, %s99
      %s117 = sphi 0, %s117
      %s119 = sphi 0, %s117
      %s120 = sphi 0, %s119
      %s134 = sphi 0, %s120
      %s138 = sphi 0, %s138
      %s140 = sphi 0, %s138
      %s141 = sphi 0, %s140
      %s155 = sphi 0, %s141
      %s159 = sphi 0, %s159
      %s161 = sphi 0, %s159
      %s162 = sphi 0, %s161
      %s176 = sphi 0, %s162
      %s182 = sphi 0, %s184
      %s185 = sphi 0, %s182
      %s186 = sphi 0, %s185
      %s202 = sphi 0, %s186
    $region4: #{tpu_custom_call.1} parent=1 // loop_header_branch
      %23 = sbr.rel (%p21) target = $region8
    $region5: #{tpu_custom_call.1} parent=1 // loop_body
      %s25 = ssub.s32 %s20, 1
      %s26 = ssub.s32 %s20, 2
      %s27 = sadd.s32 %s20, 1
      %s28 = ssub.s32 %s20, %s27
      %p29 = scmp.eq.s32.totalorder %s28, 0
      %s31 = sadd.s32 %s30, 1
      %s32 = scalar_select %p29, %s30, %s31
      %p35 = pneg %p29
      %p36 = scmp.eq.s32.totalorder %s20, 1
      %p37 = por %p35, %p36
      %p38 = scmp.ne.s32.totalorder %s30, %s33
      %p39 = scmp.eq.s32.totalorder %s20, 0
      %p40 = por %p38, %p39
      %p41 = scmp.ne.s32.totalorder %s30, %s33
      %p42 = scmp.eq.s32.totalorder %s25, 1
      %p43 = por %p41, %p42
      %p44 = scmp.ne.s32.totalorder %s33, %s34
      %p45 = scmp.eq.s32.totalorder %s25, 0
      %p46 = por %p44, %p45
      %p47 = scmp.ne.s32.totalorder %s33, %s34
      %p48 = scmp.eq.s32.totalorder %s26, 1
      %p49 = por %p47, %p48
      %p51 = scmp.ne.s32.totalorder %s34, %s50
      %p52 = scmp.eq.s32.totalorder %s26, 0
      %p53 = por %p51, %p52
      %s55 = sadd.s32 %s54, 1
      %p58 = scmp.eq.s32.totalorder %s20, 1
      %p59 = scmp.ne.s32.totalorder %s54, %s56
      %p60 = scmp.eq.s32.totalorder %s20, 0
      %p61 = por %p59, %p60
      %p62 = scmp.ne.s32.totalorder %s54, %s56
      %p63 = scmp.eq.s32.totalorder %s25, 1
      %p64 = por %p62, %p63
      %p65 = scmp.ne.s32.totalorder %s56, %s57
      %p66 = scmp.eq.s32.totalorder %s25, 0
      %p67 = por %p65, %p66
      %p68 = scmp.ne.s32.totalorder %s56, %s57
      %p69 = scmp.eq.s32.totalorder %s26, 1
      %p70 = por %p68, %p69
      %p72 = scmp.ne.s32.totalorder %s57, %s71
      %p73 = scmp.eq.s32.totalorder %s26, 0
      %p74 = por %p72, %p73
      %s76 = sadd.s32 %s75, 1
      %p79 = scmp.eq.s32.totalorder %s20, 1
      %p80 = scmp.ne.s32.totalorder %s75, %s77
      %p81 = scmp.eq.s32.totalorder %s20, 0
      %p82 = por %p80, %p81
      %p83 = scmp.ne.s32.totalorder %s75, %s77
      %p84 = scmp.eq.s32.totalorder %s25, 1
      %p85 = por %p83, %p84
      %p86 = scmp.ne.s32.totalorder %s77, %s78
      %p87 = scmp.eq.s32.totalorder %s25, 0
      %p88 = por %p86, %p87
      %p89 = scmp.ne.s32.totalorder %s77, %s78
      %p90 = scmp.eq.s32.totalorder %s26, 1
      %p91 = por %p89, %p90
      %p93 = scmp.ne.s32.totalorder %s78, %s92
      %p94 = scmp.eq.s32.totalorder %s26, 0
      %p95 = por %p93, %p94
      %s97 = sadd.s32 %s96, 1
      %p100 = scmp.eq.s32.totalorder %s20, 1
      %p101 = scmp.ne.s32.totalorder %s96, %s98
      %p102 = scmp.eq.s32.totalorder %s20, 0
      %p103 = por %p101, %p102
      %p104 = scmp.ne.s32.totalorder %s96, %s98
      %p105 = scmp.eq.s32.totalorder %s25, 1
      %p106 = por %p104, %p105
      %p107 = scmp.ne.s32.totalorder %s98, %s99
      %p108 = scmp.eq.s32.totalorder %s25, 0
      %p109 = por %p107, %p108
      %p110 = scmp.ne.s32.totalorder %s98, %s99
      %p111 = scmp.eq.s32.totalorder %s26, 1
      %p112 = por %p110, %p111
      %p114 = scmp.ne.s32.totalorder %s99, %s113
      %p115 = scmp.eq.s32.totalorder %s26, 0
      %p116 = por %p114, %p115
      %s118 = sadd.s32 %s117, 1
      %p121 = scmp.eq.s32.totalorder %s20, 1
      %p122 = scmp.ne.s32.totalorder %s117, %s119
      %p123 = scmp.eq.s32.totalorder %s20, 0
      %p124 = por %p122, %p123
      %p125 = scmp.ne.s32.totalorder %s117, %s119
      %p126 = scmp.eq.s32.totalorder %s25, 1
      %p127 = por %p125, %p126
      %p128 = scmp.ne.s32.totalorder %s119, %s120
      %p129 = scmp.eq.s32.totalorder %s25, 0
      %p130 = por %p128, %p129
      %p131 = scmp.ne.s32.totalorder %s119, %s120
      %p132 = scmp.eq.s32.totalorder %s26, 1
      %p133 = por %p131, %p132
      %p135 = scmp.ne.s32.totalorder %s120, %s134
      %p136 = scmp.eq.s32.totalorder %s26, 0
      %p137 = por %p135, %p136
      %s139 = sadd.s32 %s138, 1
      %p142 = scmp.eq.s32.totalorder %s20, 1
      %p143 = scmp.ne.s32.totalorder %s138, %s140
      %p144 = scmp.eq.s32.totalorder %s20, 0
      %p145 = por %p143, %p144
      %p146 = scmp.ne.s32.totalorder %s138, %s140
      %p147 = scmp.eq.s32.totalorder %s25, 1
      %p148 = por %p146, %p147
      %p149 = scmp.ne.s32.totalorder %s140, %s141
      %p150 = scmp.eq.s32.totalorder %s25, 0
      %p151 = por %p149, %p150
      %p152 = scmp.ne.s32.totalorder %s140, %s141
      %p153 = scmp.eq.s32.totalorder %s26, 1
      %p154 = por %p152, %p153
      %p156 = scmp.ne.s32.totalorder %s141, %s155
      %p157 = scmp.eq.s32.totalorder %s26, 0
      %p158 = por %p156, %p157
      %s160 = sadd.s32 %s159, 1
      %p163 = scmp.eq.s32.totalorder %s20, 1
      %p164 = scmp.ne.s32.totalorder %s159, %s161
      %p165 = scmp.eq.s32.totalorder %s20, 0
      %p166 = por %p164, %p165
      %p167 = scmp.ne.s32.totalorder %s159, %s161
      %p168 = scmp.eq.s32.totalorder %s25, 1
      %p169 = por %p167, %p168
      %p170 = scmp.ne.s32.totalorder %s161, %s162
      %p171 = scmp.eq.s32.totalorder %s25, 0
      %p172 = por %p170, %p171
      %p173 = scmp.ne.s32.totalorder %s161, %s162
      %p174 = scmp.eq.s32.totalorder %s26, 1
      %p175 = por %p173, %p174
      %p177 = scmp.ne.s32.totalorder %s162, %s176
      %p178 = scmp.eq.s32.totalorder %s26, 0
      %p179 = por %p177, %p178
      %s180 = ssub.s32 %s20, %s27
      %p181 = scmp.eq.s32.totalorder %s180, 0
      %s183 = sadd.s32 %s182, 1
      %s184 = scalar_select %p181, %s182, %s183
      %p187 = pneg %p181
      %p188 = scmp.eq.s32.totalorder %s20, 1
      %p189 = por %p187, %p188
      %p190 = scmp.ne.s32.totalorder %s182, %s185
      %p191 = scmp.eq.s32.totalorder %s20, 0
      %p192 = por %p190, %p191
      %p193 = scmp.ne.s32.totalorder %s182, %s185
      %p194 = scmp.eq.s32.totalorder %s25, 1
      %p195 = por %p193, %p194
      %p196 = scmp.ne.s32.totalorder %s185, %s186
      %p197 = scmp.eq.s32.totalorder %s25, 0
      %p198 = por %p196, %p197
      %p199 = scmp.ne.s32.totalorder %s185, %s186
      %p200 = scmp.eq.s32.totalorder %s26, 1
      %p201 = por %p199, %p200
      %p203 = scmp.ne.s32.totalorder %s186, %s202
      %p204 = scmp.eq.s32.totalorder %s26, 0
      %p205 = por %p203, %p204
      %p206 = scmp.le.s32.totalorder 1, %s20
      %p207 = scmp.lt.s32.totalorder %s20, 3
      %p208 = pnand %p206, %p207
      %p209 = pneg %p208
      // Predicated region
      $region9: #{tpu_custom_call.1} parent=5 // pred_check
        _
      $region10: #{tpu_custom_call.1} parent=5 // pred_check_branch
        %211 = sbr.rel (%p208) target = $region12
      $region11: #{tpu_custom_call.1} parent=5 // pred_region
        %s212 = ssub.s32 %s20, 1
        // Predicated region
        $region13: #{tpu_custom_call.1} parent=11 // pred_check
          %p213 = pneg %p67
        $region14: #{tpu_custom_call.1} parent=11 // pred_check_branch
          %215 = sbr.rel (%p213) target = $region16
        $region15: #{tpu_custom_call.1} parent=11 // pred_region
          %s217 = ssub.s32 512, 512
          %218 = vsyncadd [#allocation6], %s217
          %s219 = sshll.u32 [#allocation5], 4
          %s220 = int_to_ptr.vmem [resolvable:$true] %s219
          %225 = dma.hbm_to_vmem [thread:$0]  %s1, 512, %s220, [#allocation6], 128, 128, 8
        $region16: #{tpu_custom_call.1} parent=11 // pred_fallthru
          _
        // Predicated region
        $region17: #{tpu_custom_call.1} parent=11 // pred_check
          %p226 = pneg %p88
        $region18: #{tpu_custom_call.1} parent=11 // pred_check_branch
          %228 = sbr.rel (%p226) target = $region20
        $region19: #{tpu_custom_call.1} parent=11 // pred_region
          _
        $region20: #{tpu_custom_call.1} parent=11 // pred_fallthru
          _
        // Predicated region
        $region21: #{tpu_custom_call.1} parent=11 // pred_check
          %p229 = pneg %p109
        $region22: #{tpu_custom_call.1} parent=11 // pred_check_branch
          %231 = sbr.rel (%p229) target = $region24
        $region23: #{tpu_custom_call.1} parent=11 // pred_region
          %s233 = ssub.s32 512, 512
          %234 = vsyncadd [#allocation6], %s233
          %s235 = sshll.u32 [#allocation7], 4
          %s236 = int_to_ptr.vmem [resolvable:$true] %s235
          %241 = dma.hbm_to_vmem [thread:$0]  %s3, 512, %s236, [#allocation6], 64, 64, 4
        $region24: #{tpu_custom_call.1} parent=11 // pred_fallthru
          _
        // Predicated region
        $region25: #{tpu_custom_call.1} parent=11 // pred_check
          %p242 = pneg %p130
        $region26: #{tpu_custom_call.1} parent=11 // pred_check_branch
          %244 = sbr.rel (%p242) target = $region28
        $region27: #{tpu_custom_call.1} parent=11 // pred_region
          _
        $region28: #{tpu_custom_call.1} parent=11 // pred_fallthru
          _
        // Predicated region
        $region29: #{tpu_custom_call.1} parent=11 // pred_check
          %p245 = pneg %p151
        $region30: #{tpu_custom_call.1} parent=11 // pred_check_branch
          %247 = sbr.rel (%p245) target = $region32
        $region31: #{tpu_custom_call.1} parent=11 // pred_region
          _
        $region32: #{tpu_custom_call.1} parent=11 // pred_fallthru
          _
        // Predicated region
        $region33: #{tpu_custom_call.1} parent=11 // pred_check
          %p248 = pneg %p172
        $region34: #{tpu_custom_call.1} parent=11 // pred_check_branch
          %250 = sbr.rel (%p248) target = $region36
        $region35: #{tpu_custom_call.1} parent=11 // pred_region
          _
        $region36: #{tpu_custom_call.1} parent=11 // pred_fallthru
          _
      $region12: #{tpu_custom_call.1} parent=5 // pred_fallthru
        _
      %p251 = scmp.lt.s32.totalorder %s20, 2
      // Predicated region
      $region37: #{tpu_custom_call.1} parent=5 // pred_check
        %p252 = pneg %p251
      $region38: #{tpu_custom_call.1} parent=5 // pred_check_branch
        %254 = sbr.rel (%p252) target = $region40
      $region39: #{tpu_custom_call.1} parent=5 // pred_region
        // Predicated region
        $region41: #{tpu_custom_call.1} parent=39 // pred_check
          %p255 = pneg %p40
        $region42: #{tpu_custom_call.1} parent=39 // pred_check_branch
          %257 = sbr.rel (%p255) target = $region44
        $region43: #{tpu_custom_call.1} parent=39 // pred_region
          %s258 = sand.u32 %s30, 1
          %s259 = scalar_lea.sflag [#allocation3], %s258
          %s260 = sand.u32 %s30, 1
          %s261 = smul.addr %s260, 8
          %s262 = scalar_lea.vmem [#allocation2], %s261
          %s264 = ssub.s32 128, 128
          %265 = vsyncadd %s259, %s264
          %s266 = smul.addr %s20, 128
          %s267 = scalar_lea.hbm %s0, %s266
          %s269 = sshll.u32 %s262, 4
          %s270 = int_to_ptr.vmem [resolvable:$true] %s269
          %272 = dma.hbm_to_vmem [thread:$0]  %s267, 128, %s270, %s259
        $region44: #{tpu_custom_call.1} parent=39 // pred_fallthru
          _
      $region40: #{tpu_custom_call.1} parent=5 // pred_fallthru
        _
      %p273 = scmp.le.s32.totalorder 1, %s20
      %p274 = scmp.lt.s32.totalorder %s20, 3
      %p275 = pnand %p273, %p274
      %p276 = pneg %p275
      // Predicated region
      $region45: #{tpu_custom_call.1} parent=5 // pred_check
        _
      $region46: #{tpu_custom_call.1} parent=5 // pred_check_branch
        %278 = sbr.rel (%p275) target = $region48
      $region47: #{tpu_custom_call.1} parent=5 // pred_region
        %s279 = ssub.s32 %s20, 1
        %s280 = sand.u32 %s33, 1
        %s281 = scalar_lea.sflag [#allocation3], %s280
        %s282 = sand.u32 %s33, 1
        %s283 = smul.addr %s282, 8
        %s284 = scalar_lea.vmem [#allocation2], %s283
        // Predicated region
        $region49: #{tpu_custom_call.1} parent=47 // pred_check
          %p285 = pneg %p46
        $region50: #{tpu_custom_call.1} parent=47 // pred_check_branch
          %287 = sbr.rel (%p285) target = $region52
        $region51: #{tpu_custom_call.1} parent=47 // pred_region
          %288 = dma.done %s281, 128
        $region52: #{tpu_custom_call.1} parent=47 // pred_fallthru
          _
        // Predicated region
        $region53: #{tpu_custom_call.1} parent=47 // pred_check
          %p289 = pneg %p67
        $region54: #{tpu_custom_call.1} parent=47 // pred_check_branch
          %291 = sbr.rel (%p289) target = $region56
        $region55: #{tpu_custom_call.1} parent=47 // pred_region
          %292 = dma.done [#allocation6], 512
        $region56: #{tpu_custom_call.1} parent=47 // pred_fallthru
          _
        // Predicated region
        $region57: #{tpu_custom_call.1} parent=47 // pred_check
          %p293 = pneg %p109
        $region58: #{tpu_custom_call.1} parent=47 // pred_check_branch
          %295 = sbr.rel (%p293) target = $region60
        $region59: #{tpu_custom_call.1} parent=47 // pred_region
          %296 = dma.done [#allocation6], 512
        $region60: #{tpu_custom_call.1} parent=47 // pred_fallthru
          _
        %s297 = sand.u32 %s33, 1
        %s298 = scalar_lea.sflag [#allocation3], %s297
        %s299 = sand.u32 %s33, 1
        %s300 = smul.addr %s299, 8
        %s301 = scalar_lea.vmem [#allocation2], %s300
        %p302 = pneg %p46
        %p303 = pneg %p43
        %p304 = pneg %p67
        %p305 = pneg %p64
        %p306 = pneg %p88
        %p307 = pneg %p85
        %p308 = pneg %p109
        %p309 = pneg %p106
        %p310 = pneg %p130
        %p311 = pneg %p127
        %p312 = pneg %p151
        %p313 = pneg %p148
        %p314 = pneg %p172
        %p315 = pneg %p169
        %p316 = pneg %p198
        %p317 = pneg %p195
        %s318 = sand.u32 %s185, 1
        %s319 = scalar_lea.sflag [#allocation4], %s318
        %s320 = sand.u32 %s185, 1
        %s321 = smul.addr %s320, 8
        %s322 = scalar_lea.vmem [#allocation8], %s321
        %v323 = vld [vmem:[%s284] sm:$0xff]
        %v324 = vld [vmem:[#allocation5] sm:$0xff]
        %v325 = vld [vmem:[#allocation5 + $0x8] sm:$0xff]
        %v326 = vld [vmem:[#allocation5 + $0x10] sm:$0xff]
        %v327 = vld [vmem:[#allocation5 + $0x18] sm:$0xff]
        %v328 = vld [vmem:[%s2] sm:$0x1]
        %v330 = vlaneseq
        %v331 = vshrl.u32 %v330, 7
        %v332 = vsub.s32 0, %v331
        %v333 = vrot.slane %v328, %v332
        %vm335 = vcmask 261120
        %v337 = vsel %vm335, %v323, 0
        %339 = vmatprep.subr.mxu0 0.0
        %340 = vmatpush1.msra.mxu0 %v324
        %341 = vmatprep.subr.mxu0 0.0
        %342 = vmatpush1.msra.mxu0 %v325
        %343 = vmatprep.subr.mxu0 0.0
        %344 = vmatpush1.msra.mxu0 %v326
        %345 = vmatprep.subr.mxu0 0.0
        %346 = vmatpush1.msra.mxu0 %v327
        %347 = vmatprep.subr.mxu0 0.0
        %348 = vmatpush1.msra.mxu0 0.0
        %349 = vmatprep.subr.mxu0 0.0
        %350 = vmatpush1.msra.mxu0 0.0
        %351 = vmatprep.subr.mxu0 0.0
        %352 = vmatpush1.msra.mxu0 0.0
        %353 = vmatprep.subr.mxu0 0.0
        %354 = vmatpush1.msra.mxu0 0.0
        %355 = vmatprep.subr.mxu0 0.0
        %356 = vmatpush1.msra.mxu0 0.0
        %357 = vmatprep.subr.mxu0 0.0
        %358 = vmatpush1.msra.mxu0 0.0
        %359 = vmatprep.subr.mxu0 0.0
        %360 = vmatpush1.msra.mxu0 0.0
        %361 = vmatprep.subr.mxu0 0.0
        %362 = vmatpush1.msra.mxu0 0.0
        %363 = vmatprep.subr.mxu0 0.0
        %364 = vmatpush1.msra.mxu0 0.0
        %365 = vmatprep.subr.mxu0 0.0
        %366 = vmatpush1.msra.mxu0 0.0
        %367 = vmatprep.subr.mxu0 0.0
        %368 = vmatpush1.msra.mxu0 0.0
        %369 = vmatprep.subr.mxu0 0.0
        %370 = vmatpush1.msra.mxu0 0.0
        %371 = vmatprep.subr.mxu0 0.0
        %372 = vmatpush1.msra.mxu0 0.0
        %373 = vmatprep.subr.mxu0 0.0
        %374 = vmatpush1.msra.mxu0 0.0
        %375 = vmatprep.subr.mxu0 0.0
        %376 = vmatpush1.msra.mxu0 0.0
        %377 = vmatprep.subr.mxu0 0.0
        %378 = vmatpush1.msra.mxu0 0.0
        %379 = vmatprep.subr.mxu0 0.0
        %380 = vmatpush1.msra.mxu0 0.0
        %381 = vmatprep.subr.mxu0 0.0
        %382 = vmatpush1.msra.mxu0 0.0
        %383 = vmatprep.subr.mxu0 0.0
        %384 = vmatpush1.msra.mxu0 0.0
        %385 = vmatprep.subr.mxu0 0.0
        %386 = vmatpush1.msra.mxu0 0.0
        %387 = vmatprep.subr.mxu0 0.0
        %388 = vmatpush1.msra.mxu0 0.0
        %389 = vmatprep.subr.mxu0 0.0
        %390 = vmatpush1.msra.mxu0 0.0
        %391 = vmatprep.subr.mxu0 0.0
        %392 = vmatpush1.msra.mxu0 0.0
        %393 = vmatprep.subr.mxu0 0.0
        %394 = vmatpush1.msra.mxu0 0.0
        %395 = vmatprep.subr.mxu0 0.0
        %396 = vmatpush1.msra.mxu0 0.0
        %397 = vmatprep.subr.mxu0 0.0
        %398 = vmatpush1.msra.mxu0 0.0
        %399 = vmatprep.subr.mxu0 0.0
        %400 = vmatpush1.msra.mxu0 0.0
        %401 = vmatprep.subr.mxu0 0.0
        %402 = vmatpush1.msra.mxu0 0.0
        %403 = vmatprep.mubr.f32.mxu0 0.0
        %404 = vmatmul.mubr.f32.gmra.mrb[0].mxu0 %v337
        %v405 = vpop.f32.mrb[0].mxu0
        %v406 = vadd.f32 %v333, %v405
        %v407 = vpop.f32.mrb[0].mxu0
        %408 = vdwg.mxu0
        %v409 = vld [vmem:[%s4] sm:$0x1]
        %v411 = vlaneseq
        %v412 = vshrl.u32 %v411, 7
        %v413 = vsub.s32 0, %v412
        %v414 = vrot.slane %v409, %v413
        %v416 = vadd.f32 %v323, %v414
        %418 = vrot.lane.b32.xlu0 %v406, 96
        %v419 = vpop.permute.xlu0 %418
        %vm420 = vcmask 31744
        %v421 = vsel %vm420, %v406, 0
        %v423 = vsel %vm420, %v419, 0
        %425 = vmatprep.subr.mxu0 0.0
        %426 = vmatpush1.xpose.msra.mxu0 %v423
        %427 = vmatprep.subr.mxu0 0.0
        %428 = vmatpush1.xpose.msra.mxu0 0.0
        %429 = vmatprep.subr.mxu0 0.0
        %430 = vmatpush1.xpose.msra.mxu0 0.0
        %431 = vmatprep.subr.mxu0 0.0
        %432 = vmatpush1.xpose.msra.mxu0 0.0
        %433 = vmatprep.subr.mxu0 0.0
        %434 = vmatpush1.xpose.msra.mxu0 0.0
        %435 = vmatprep.subr.mxu0 0.0
        %436 = vmatpush1.xpose.msra.mxu0 0.0
        %437 = vmatprep.subr.mxu0 0.0
        %438 = vmatpush1.xpose.msra.mxu0 0.0
        %439 = vmatprep.subr.mxu0 0.0
        %440 = vmatpush1.xpose.msra.mxu0 0.0
        %441 = vmatprep.subr.mxu0 0.0
        %442 = vmatpush1.xpose.msra.mxu0 0.0
        %443 = vmatprep.subr.mxu0 0.0
        %444 = vmatpush1.xpose.msra.mxu0 0.0
        %445 = vmatprep.subr.mxu0 0.0
        %446 = vmatpush1.xpose.msra.mxu0 0.0
        %447 = vmatprep.subr.mxu0 0.0
        %448 = vmatpush1.xpose.msra.mxu0 0.0
        %449 = vmatprep.subr.mxu0 0.0
        %450 = vmatpush1.xpose.msra.mxu0 0.0
        %451 = vmatprep.subr.mxu0 0.0
        %452 = vmatpush1.xpose.msra.mxu0 0.0
        %453 = vmatprep.subr.mxu0 0.0
        %454 = vmatpush1.xpose.msra.mxu0 0.0
        %455 = vmatprep.subr.mxu0 0.0
        %456 = vmatpush1.xpose.msra.mxu0 0.0
        %457 = vmatprep.subr.mxu0 0.0
        %458 = vmatpush1.xpose.msra.mxu0 0.0
        %459 = vmatprep.subr.mxu0 0.0
        %460 = vmatpush1.xpose.msra.mxu0 0.0
        %461 = vmatprep.subr.mxu0 0.0
        %462 = vmatpush1.xpose.msra.mxu0 0.0
        %463 = vmatprep.subr.mxu0 0.0
        %464 = vmatpush1.xpose.msra.mxu0 0.0
        %465 = vmatprep.subr.mxu0 0.0
        %466 = vmatpush1.xpose.msra.mxu0 0.0
        %467 = vmatprep.subr.mxu0 0.0
        %468 = vmatpush1.xpose.msra.mxu0 0.0
        %469 = vmatprep.subr.mxu0 0.0
        %470 = vmatpush1.xpose.msra.mxu0 0.0
        %471 = vmatprep.subr.mxu0 0.0
        %472 = vmatpush1.xpose.msra.mxu0 0.0
        %473 = vmatprep.subr.mxu0 0.0
        %474 = vmatpush1.xpose.msra.mxu0 0.0
        %475 = vmatprep.subr.mxu0 0.0
        %476 = vmatpush1.xpose.msra.mxu0 0.0
        %477 = vmatprep.subr.mxu0 0.0
        %478 = vmatpush1.xpose.msra.mxu0 0.0
        %479 = vmatprep.subr.mxu0 0.0
        %480 = vmatpush1.xpose.msra.mxu0 0.0
        %481 = vmatprep.subr.mxu0 0.0
        %482 = vmatpush1.xpose.msra.mxu0 0.0
        %483 = vmatprep.subr.mxu0 0.0
        %484 = vmatpush1.xpose.msra.mxu0 0.0
        %485 = vmatprep.subr.mxu0 0.0
        %486 = vmatpush1.xpose.msra.mxu0 0.0
        %487 = vmatprep.subr.mxu0 0.0
        %488 = vmatpush1.xpose.msra.mxu0 0.0
        %489 = vmatprep.mubr.f32.mxu0 0.0
        %490 = vmatmul.mubr.f32.gmra.mrb[0].mxu0 %v421
        %v491 = vpop.f32.mrb[0].mxu0
        %v492 = vadd.f32 0.0, %v491
        %v493 = vpop.f32.mrb[0].mxu0
        %494 = vdwg.mxu0
        %vm495 = vcmask 64512
        %v496 = vsel %vm495, %v492, -inf
        %497 = vmax.xlane.f32.xlu0 %v496
        %v498 = vpop.xlane.xlu0 %497
        %v499 = vsub.f32 %v492, %v498
        %v500 = vmul.f32 %v499, 1.442695
        %v501 = vpow.pop %v500
        %v502 = vsel %vm495, %v501, 0.0
        %503 = vadd.xlane.f32.xlu0 %v502
        %v504 = vpop.xlane.xlu0 %503
        %505 = vrot.lane.b32.xlu0 %v406, 64
        %v506 = vpop.permute.xlu0 %505
        %v509 = vsel %vm495, %v501, 0
        %511 = vmatprep.subr.mxu0 0.0
        %512 = vmatpush1.msra.mxu0 %v506
        %513 = vmatprep.subr.mxu0 0.0
        %514 = vmatpush1.msra.mxu0 0.0
        %515 = vmatprep.subr.mxu0 0.0
        %516 = vmatpush1.msra.mxu0 0.0
        %517 = vmatprep.subr.mxu0 0.0
        %518 = vmatpush1.msra.mxu0 0.0
        %519 = vmatprep.subr.mxu0 0.0
        %520 = vmatpush1.msra.mxu0 0.0
        %521 = vmatprep.subr.mxu0 0.0
        %522 = vmatpush1.msra.mxu0 0.0
        %523 = vmatprep.subr.mxu0 0.0
        %524 = vmatpush1.msra.mxu0 0.0
        %525 = vmatprep.subr.mxu0 0.0
        %526 = vmatpush1.msra.mxu0 0.0
        %527 = vmatprep.subr.mxu0 0.0
        %528 = vmatpush1.msra.mxu0 0.0
        %529 = vmatprep.subr.mxu0 0.0
        %530 = vmatpush1.msra.mxu0 0.0
        %531 = vmatprep.subr.mxu0 0.0
        %532 = vmatpush1.msra.mxu0 0.0
        %533 = vmatprep.subr.mxu0 0.0
        %534 = vmatpush1.msra.mxu0 0.0
        %535 = vmatprep.subr.mxu0 0.0
        %536 = vmatpush1.msra.mxu0 0.0
        %537 = vmatprep.subr.mxu0 0.0
        %538 = vmatpush1.msra.mxu0 0.0
        %539 = vmatprep.subr.mxu0 0.0
        %540 = vmatpush1.msra.mxu0 0.0
        %541 = vmatprep.subr.mxu0 0.0
        %542 = vmatpush1.msra.mxu0 0.0
        %543 = vmatprep.subr.mxu0 0.0
        %544 = vmatpush1.msra.mxu0 0.0
        %545 = vmatprep.subr.mxu0 0.0
        %546 = vmatpush1.msra.mxu0 0.0
        %547 = vmatprep.subr.mxu0 0.0
        %548 = vmatpush1.msra.mxu0 0.0
        %549 = vmatprep.subr.mxu0 0.0
        %550 = vmatpush1.msra.mxu0 0.0
        %551 = vmatprep.subr.mxu0 0.0
        %552 = vmatpush1.msra.mxu0 0.0
        %553 = vmatprep.subr.mxu0 0.0
        %554 = vmatpush1.msra.mxu0 0.0
        %555 = vmatprep.subr.mxu0 0.0
        %556 = vmatpush1.msra.mxu0 0.0
        %557 = vmatprep.subr.mxu0 0.0
        %558 = vmatpush1.msra.mxu0 0.0
        %559 = vmatprep.subr.mxu0 0.0
        %560 = vmatpush1.msra.mxu0 0.0
        %561 = vmatprep.subr.mxu0 0.0
        %562 = vmatpush1.msra.mxu0 0.0
        %563 = vmatprep.subr.mxu0 0.0
        %564 = vmatpush1.msra.mxu0 0.0
        %565 = vmatprep.subr.mxu0 0.0
        %566 = vmatpush1.msra.mxu0 0.0
        %567 = vmatprep.subr.mxu0 0.0
        %568 = vmatpush1.msra.mxu0 0.0
        %569 = vmatprep.subr.mxu0 0.0
        %570 = vmatpush1.msra.mxu0 0.0
        %571 = vmatprep.subr.mxu0 0.0
        %572 = vmatpush1.msra.mxu0 0.0
        %573 = vmatprep.subr.mxu0 0.0
        %574 = vmatpush1.msra.mxu0 0.0
        %575 = vmatprep.mubr.f32.mxu0 0.0
        %576 = vmatmul.mubr.f32.gmra.mrb[0].mxu0 %v509
        %v577 = vpop.f32.mrb[0].mxu0
        %v578 = vadd.f32 0.0, %v577
        %v579 = vpop.f32.mrb[0].mxu0
        %580 = vdwg.mxu0
        %v581 = vrcp.pop %v504
        %v582 = vmul.f32 %v578, %v581
        %v583 = vld [vmem:[#allocation7] sm:$0xf]
        %v585 = vsel %vm420, %v582, 0
        %vm587 = vcmask 1043456
        %v589 = vsel %vm587, %v583, 0
        %591 = vmatprep.subr.mxu0 0.0
        %592 = vmatpush1.msra.mxu0 %v589
        %593 = vmatprep.subr.mxu0 0.0
        %594 = vmatpush1.msra.mxu0 0.0
        %595 = vmatprep.subr.mxu0 0.0
        %596 = vmatpush1.msra.mxu0 0.0
        %597 = vmatprep.subr.mxu0 0.0
        %598 = vmatpush1.msra.mxu0 0.0
        %599 = vmatprep.subr.mxu0 0.0
        %600 = vmatpush1.msra.mxu0 0.0
        %601 = vmatprep.subr.mxu0 0.0
        %602 = vmatpush1.msra.mxu0 0.0
        %603 = vmatprep.subr.mxu0 0.0
        %604 = vmatpush1.msra.mxu0 0.0
        %605 = vmatprep.subr.mxu0 0.0
        %606 = vmatpush1.msra.mxu0 0.0
        %607 = vmatprep.subr.mxu0 0.0
        %608 = vmatpush1.msra.mxu0 0.0
        %609 = vmatprep.subr.mxu0 0.0
        %610 = vmatpush1.msra.mxu0 0.0
        %611 = vmatprep.subr.mxu0 0.0
        %612 = vmatpush1.msra.mxu0 0.0
        %613 = vmatprep.subr.mxu0 0.0
        %614 = vmatpush1.msra.mxu0 0.0
        %615 = vmatprep.subr.mxu0 0.0
        %616 = vmatpush1.msra.mxu0 0.0
        %617 = vmatprep.subr.mxu0 0.0
        %618 = vmatpush1.msra.mxu0 0.0
        %619 = vmatprep.subr.mxu0 0.0
        %620 = vmatpush1.msra.mxu0 0.0
        %621 = vmatprep.subr.mxu0 0.0
        %622 = vmatpush1.msra.mxu0 0.0
        %623 = vmatprep.subr.mxu0 0.0
        %624 = vmatpush1.msra.mxu0 0.0
        %625 = vmatprep.subr.mxu0 0.0
        %626 = vmatpush1.msra.mxu0 0.0
        %627 = vmatprep.subr.mxu0 0.0
        %628 = vmatpush1.msra.mxu0 0.0
        %629 = vmatprep.subr.mxu0 0.0
        %630 = vmatpush1.msra.mxu0 0.0
        %631 = vmatprep.subr.mxu0 0.0
        %632 = vmatpush1.msra.mxu0 0.0
        %633 = vmatprep.subr.mxu0 0.0
        %634 = vmatpush1.msra.mxu0 0.0
        %635 = vmatprep.subr.mxu0 0.0
        %636 = vmatpush1.msra.mxu0 0.0
        %637 = vmatprep.subr.mxu0 0.0
        %638 = vmatpush1.msra.mxu0 0.0
        %639 = vmatprep.subr.mxu0 0.0
        %640 = vmatpush1.msra.mxu0 0.0
        %641 = vmatprep.subr.mxu0 0.0
        %642 = vmatpush1.msra.mxu0 0.0
        %643 = vmatprep.subr.mxu0 0.0
        %644 = vmatpush1.msra.mxu0 0.0
        %645 = vmatprep.subr.mxu0 0.0
        %646 = vmatpush1.msra.mxu0 0.0
        %647 = vmatprep.subr.mxu0 0.0
        %648 = vmatpush1.msra.mxu0 0.0
        %649 = vmatprep.subr.mxu0 0.0
        %650 = vmatpush1.msra.mxu0 0.0
        %651 = vmatprep.subr.mxu0 0.0
        %652 = vmatpush1.msra.mxu0 0.0
        %653 = vmatprep.subr.mxu0 0.0
        %654 = vmatpush1.msra.mxu0 0.0
        %655 = vmatprep.mubr.f32.mxu0 0.0
        %656 = vmatmul.mubr.f32.gmra.mrb[0].mxu0 %v585
        %v657 = vpop.f32.mrb[0].mxu0
        %v658 = vadd.f32 0.0, %v657
        %v659 = vpop.f32.mrb[0].mxu0
        %660 = vdwg.mxu0
        %v661 = vadd.f32 %v416, %v658
        %662 = vrot.lane.b32.xlu0 %v406, 124
        %v663 = vpop.permute.xlu0 %662
        %664 = vrot.lane.b32.xlu0 %v406, 92
        %v665 = vpop.permute.xlu0 %664
        %v666 = vsel %vm420, %v663, 0
        %v668 = vsel %vm420, %v665, 0
        %670 = vmatprep.subr.mxu0 0.0
        %671 = vmatpush1.xpose.msra.mxu0 %v668
        %672 = vmatprep.subr.mxu0 0.0
        %673 = vmatpush1.xpose.msra.mxu0 0.0
        %674 = vmatprep.subr.mxu0 0.0
        %675 = vmatpush1.xpose.msra.mxu0 0.0
        %676 = vmatprep.subr.mxu0 0.0
        %677 = vmatpush1.xpose.msra.mxu0 0.0
        %678 = vmatprep.subr.mxu0 0.0
        %679 = vmatpush1.xpose.msra.mxu0 0.0
        %680 = vmatprep.subr.mxu0 0.0
        %681 = vmatpush1.xpose.msra.mxu0 0.0
        %682 = vmatprep.subr.mxu0 0.0
        %683 = vmatpush1.xpose.msra.mxu0 0.0
        %684 = vmatprep.subr.mxu0 0.0
        %685 = vmatpush1.xpose.msra.mxu0 0.0
        %686 = vmatprep.subr.mxu0 0.0
        %687 = vmatpush1.xpose.msra.mxu0 0.0
        %688 = vmatprep.subr.mxu0 0.0
        %689 = vmatpush1.xpose.msra.mxu0 0.0
        %690 = vmatprep.subr.mxu0 0.0
        %691 = vmatpush1.xpose.msra.mxu0 0.0
        %692 = vmatprep.subr.mxu0 0.0
        %693 = vmatpush1.xpose.msra.mxu0 0.0
        %694 = vmatprep.subr.mxu0 0.0
        %695 = vmatpush1.xpose.msra.mxu0 0.0
        %696 = vmatprep.subr.mxu0 0.0
        %697 = vmatpush1.xpose.msra.mxu0 0.0
        %698 = vmatprep.subr.mxu0 0.0
        %699 = vmatpush1.xpose.msra.mxu0 0.0
        %700 = vmatprep.subr.mxu0 0.0
        %701 = vmatpush1.xpose.msra.mxu0 0.0
        %702 = vmatprep.subr.mxu0 0.0
        %703 = vmatpush1.xpose.msra.mxu0 0.0
        %704 = vmatprep.subr.mxu0 0.0
        %705 = vmatpush1.xpose.msra.mxu0 0.0
        %706 = vmatprep.subr.mxu0 0.0
        %707 = vmatpush1.xpose.msra.mxu0 0.0
        %708 = vmatprep.subr.mxu0 0.0
        %709 = vmatpush1.xpose.msra.mxu0 0.0
        %710 = vmatprep.subr.mxu0 0.0
        %711 = vmatpush1.xpose.msra.mxu0 0.0
        %712 = vmatprep.subr.mxu0 0.0
        %713 = vmatpush1.xpose.msra.mxu0 0.0
        %714 = vmatprep.subr.mxu0 0.0
        %715 = vmatpush1.xpose.msra.mxu0 0.0
        %716 = vmatprep.subr.mxu0 0.0
        %717 = vmatpush1.xpose.msra.mxu0 0.0
        %718 = vmatprep.subr.mxu0 0.0
        %719 = vmatpush1.xpose.msra.mxu0 0.0
        %720 = vmatprep.subr.mxu0 0.0
        %721 = vmatpush1.xpose.msra.mxu0 0.0
        %722 = vmatprep.subr.mxu0 0.0
        %723 = vmatpush1.xpose.msra.mxu0 0.0
        %724 = vmatprep.subr.mxu0 0.0
        %725 = vmatpush1.xpose.msra.mxu0 0.0
        %726 = vmatprep.subr.mxu0 0.0
        %727 = vmatpush1.xpose.msra.mxu0 0.0
        %728 = vmatprep.subr.mxu0 0.0
        %729 = vmatpush1.xpose.msra.mxu0 0.0
        %730 = vmatprep.subr.mxu0 0.0
        %731 = vmatpush1.xpose.msra.mxu0 0.0
        %732 = vmatprep.subr.mxu0 0.0
        %733 = vmatpush1.xpose.msra.mxu0 0.0
        %734 = vmatprep.mubr.f32.mxu0 0.0
        %735 = vmatmul.mubr.f32.gmra.mrb[0].mxu0 %v666
        %v736 = vpop.f32.mrb[0].mxu0
        %v737 = vadd.f32 0.0, %v736
        %v738 = vpop.f32.mrb[0].mxu0
        %739 = vdwg.mxu0
        %v740 = vsel %vm495, %v737, -inf
        %741 = vmax.xlane.f32.xlu0 %v740
        %v742 = vpop.xlane.xlu0 %741
        %v743 = vsub.f32 %v737, %v742
        %v744 = vmul.f32 %v743, 1.442695
        %v745 = vpow.pop %v744
        %v746 = vsel %vm495, %v745, 0.0
        %747 = vadd.xlane.f32.xlu0 %v746
        %v748 = vpop.xlane.xlu0 %747
        %749 = vrot.lane.b32.xlu0 %v406, 60
        %v750 = vpop.permute.xlu0 %749
        %v753 = vsel %vm495, %v745, 0
        %755 = vmatprep.subr.mxu0 0.0
        %756 = vmatpush1.msra.mxu0 %v750
        %757 = vmatprep.subr.mxu0 0.0
        %758 = vmatpush1.msra.mxu0 0.0
        %759 = vmatprep.subr.mxu0 0.0
        %760 = vmatpush1.msra.mxu0 0.0
        %761 = vmatprep.subr.mxu0 0.0
        %762 = vmatpush1.msra.mxu0 0.0
        %763 = vmatprep.subr.mxu0 0.0
        %764 = vmatpush1.msra.mxu0 0.0
        %765 = vmatprep.subr.mxu0 0.0
        %766 = vmatpush1.msra.mxu0 0.0
        %767 = vmatprep.subr.mxu0 0.0
        %768 = vmatpush1.msra.mxu0 0.0
        %769 = vmatprep.subr.mxu0 0.0
        %770 = vmatpush1.msra.mxu0 0.0
        %771 = vmatprep.subr.mxu0 0.0
        %772 = vmatpush1.msra.mxu0 0.0
        %773 = vmatprep.subr.mxu0 0.0
        %774 = vmatpush1.msra.mxu0 0.0
        %775 = vmatprep.subr.mxu0 0.0
        %776 = vmatpush1.msra.mxu0 0.0
        %777 = vmatprep.subr.mxu0 0.0
        %778 = vmatpush1.msra.mxu0 0.0
        %779 = vmatprep.subr.mxu0 0.0
        %780 = vmatpush1.msra.mxu0 0.0
        %781 = vmatprep.subr.mxu0 0.0
        %782 = vmatpush1.msra.mxu0 0.0
        %783 = vmatprep.subr.mxu0 0.0
        %784 = vmatpush1.msra.mxu0 0.0
        %785 = vmatprep.subr.mxu0 0.0
        %786 = vmatpush1.msra.mxu0 0.0
        %787 = vmatprep.subr.mxu0 0.0
        %788 = vmatpush1.msra.mxu0 0.0
        %789 = vmatprep.subr.mxu0 0.0
        %790 = vmatpush1.msra.mxu0 0.0
        %791 = vmatprep.subr.mxu0 0.0
        %792 = vmatpush1.msra.mxu0 0.0
        %793 = vmatprep.subr.mxu0 0.0
        %794 = vmatpush1.msra.mxu0 0.0
        %795 = vmatprep.subr.mxu0 0.0
        %796 = vmatpush1.msra.mxu0 0.0
        %797 = vmatprep.subr.mxu0 0.0
        %798 = vmatpush1.msra.mxu0 0.0
        %799 = vmatprep.subr.mxu0 0.0
        %800 = vmatpush1.msra.mxu0 0.0
        %801 = vmatprep.subr.mxu0 0.0
        %802 = vmatpush1.msra.mxu0 0.0
        %803 = vmatprep.subr.mxu0 0.0
        %804 = vmatpush1.msra.mxu0 0.0
        %805 = vmatprep.subr.mxu0 0.0
        %806 = vmatpush1.msra.mxu0 0.0
        %807 = vmatprep.subr.mxu0 0.0
        %808 = vmatpush1.msra.mxu0 0.0
        %809 = vmatprep.subr.mxu0 0.0
        %810 = vmatpush1.msra.mxu0 0.0
        %811 = vmatprep.subr.mxu0 0.0
        %812 = vmatpush1.msra.mxu0 0.0
        %813 = vmatprep.subr.mxu0 0.0
        %814 = vmatpush1.msra.mxu0 0.0
        %815 = vmatprep.subr.mxu0 0.0
        %816 = vmatpush1.msra.mxu0 0.0
        %817 = vmatprep.subr.mxu0 0.0
        %818 = vmatpush1.msra.mxu0 0.0
        %819 = vmatprep.mubr.f32.mxu0 0.0
        %820 = vmatmul.mubr.f32.gmra.mrb[0].mxu0 %v753
        %v821 = vpop.f32.mrb[0].mxu0
        %v822 = vadd.f32 0.0, %v821
        %v823 = vpop.f32.mrb[0].mxu0
        %824 = vdwg.mxu0
        %v825 = vrcp.pop %v748
        %v826 = vmul.f32 %v822, %v825
        %s827 = scalar_lea.vmem [#allocation7], 4
        %v828 = vld [vmem:[%s827] sm:$0xf]
        %v830 = vsel %vm420, %v826, 0
        %v833 = vsel %vm587, %v828, 0
        %835 = vmatprep.subr.mxu0 0.0
        %836 = vmatpush1.msra.mxu0 %v833
        %837 = vmatprep.subr.mxu0 0.0
        %838 = vmatpush1.msra.mxu0 0.0
        %839 = vmatprep.subr.mxu0 0.0
        %840 = vmatpush1.msra.mxu0 0.0
        %841 = vmatprep.subr.mxu0 0.0
        %842 = vmatpush1.msra.mxu0 0.0
        %843 = vmatprep.subr.mxu0 0.0
        %844 = vmatpush1.msra.mxu0 0.0
        %845 = vmatprep.subr.mxu0 0.0
        %846 = vmatpush1.msra.mxu0 0.0
        %847 = vmatprep.subr.mxu0 0.0
        %848 = vmatpush1.msra.mxu0 0.0
        %849 = vmatprep.subr.mxu0 0.0
        %850 = vmatpush1.msra.mxu0 0.0
        %851 = vmatprep.subr.mxu0 0.0
        %852 = vmatpush1.msra.mxu0 0.0
        %853 = vmatprep.subr.mxu0 0.0
        %854 = vmatpush1.msra.mxu0 0.0
        %855 = vmatprep.subr.mxu0 0.0
        %856 = vmatpush1.msra.mxu0 0.0
        %857 = vmatprep.subr.mxu0 0.0
        %858 = vmatpush1.msra.mxu0 0.0
        %859 = vmatprep.subr.mxu0 0.0
        %860 = vmatpush1.msra.mxu0 0.0
        %861 = vmatprep.subr.mxu0 0.0
        %862 = vmatpush1.msra.mxu0 0.0
        %863 = vmatprep.subr.mxu0 0.0
        %864 = vmatpush1.msra.mxu0 0.0
        %865 = vmatprep.subr.mxu0 0.0
        %866 = vmatpush1.msra.mxu0 0.0
        %867 = vmatprep.subr.mxu0 0.0
        %868 = vmatpush1.msra.mxu0 0.0
        %869 = vmatprep.subr.mxu0 0.0
        %870 = vmatpush1.msra.mxu0 0.0
        %871 = vmatprep.subr.mxu0 0.0
        %872 = vmatpush1.msra.mxu0 0.0
        %873 = vmatprep.subr.mxu0 0.0
        %874 = vmatpush1.msra.mxu0 0.0
        %875 = vmatprep.subr.mxu0 0.0
        %876 = vmatpush1.msra.mxu0 0.0
        %877 = vmatprep.subr.mxu0 0.0
        %878 = vmatpush1.msra.mxu0 0.0
        %879 = vmatprep.subr.mxu0 0.0
        %880 = vmatpush1.msra.mxu0 0.0
        %881 = vmatprep.subr.mxu0 0.0
        %882 = vmatpush1.msra.mxu0 0.0
        %883 = vmatprep.subr.mxu0 0.0
        %884 = vmatpush1.msra.mxu0 0.0
        %885 = vmatprep.subr.mxu0 0.0
        %886 = vmatpush1.msra.mxu0 0.0
        %887 = vmatprep.subr.mxu0 0.0
        %888 = vmatpush1.msra.mxu0 0.0
        %889 = vmatprep.subr.mxu0 0.0
        %890 = vmatpush1.msra.mxu0 0.0
        %891 = vmatprep.subr.mxu0 0.0
        %892 = vmatpush1.msra.mxu0 0.0
        %893 = vmatprep.subr.mxu0 0.0
        %894 = vmatpush1.msra.mxu0 0.0
        %895 = vmatprep.subr.mxu0 0.0
        %896 = vmatpush1.msra.mxu0 0.0
        %897 = vmatprep.subr.mxu0 0.0
        %898 = vmatpush1.msra.mxu0 0.0
        %899 = vmatprep.mubr.f32.mxu0 0.0
        %900 = vmatmul.mubr.f32.gmra.mrb[0].mxu0 %v830
        %v901 = vpop.f32.mrb[0].mxu0
        %v902 = vadd.f32 0.0, %v901
        %v903 = vpop.f32.mrb[0].mxu0
        %904 = vdwg.mxu0
        %v905 = vadd.f32 %v661, %v902
        %906 = vrot.lane.b32.xlu0 %v406, 120
        %v907 = vpop.permute.xlu0 %906
        %908 = vrot.lane.b32.xlu0 %v406, 88
        %v909 = vpop.permute.xlu0 %908
        %v910 = vsel %vm420, %v907, 0
        %v912 = vsel %vm420, %v909, 0
        %914 = vmatprep.subr.mxu0 0.0
        %915 = vmatpush1.xpose.msra.mxu0 %v912
        %916 = vmatprep.subr.mxu0 0.0
        %917 = vmatpush1.xpose.msra.mxu0 0.0
        %918 = vmatprep.subr.mxu0 0.0
        %919 = vmatpush1.xpose.msra.mxu0 0.0
        %920 = vmatprep.subr.mxu0 0.0
        %921 = vmatpush1.xpose.msra.mxu0 0.0
        %922 = vmatprep.subr.mxu0 0.0
        %923 = vmatpush1.xpose.msra.mxu0 0.0
        %924 = vmatprep.subr.mxu0 0.0
        %925 = vmatpush1.xpose.msra.mxu0 0.0
        %926 = vmatprep.subr.mxu0 0.0
        %927 = vmatpush1.xpose.msra.mxu0 0.0
        %928 = vmatprep.subr.mxu0 0.0
        %929 = vmatpush1.xpose.msra.mxu0 0.0
        %930 = vmatprep.subr.mxu0 0.0
        %931 = vmatpush1.xpose.msra.mxu0 0.0
        %932 = vmatprep.subr.mxu0 0.0
        %933 = vmatpush1.xpose.msra.mxu0 0.0
        %934 = vmatprep.subr.mxu0 0.0
        %935 = vmatpush1.xpose.msra.mxu0 0.0
        %936 = vmatprep.subr.mxu0 0.0
        %937 = vmatpush1.xpose.msra.mxu0 0.0
        %938 = vmatprep.subr.mxu0 0.0
        %939 = vmatpush1.xpose.msra.mxu0 0.0
        %940 = vmatprep.subr.mxu0 0.0
        %941 = vmatpush1.xpose.msra.mxu0 0.0
        %942 = vmatprep.subr.mxu0 0.0
        %943 = vmatpush1.xpose.msra.mxu0 0.0
        %944 = vmatprep.subr.mxu0 0.0
        %945 = vmatpush1.xpose.msra.mxu0 0.0
        %946 = vmatprep.subr.mxu0 0.0
        %947 = vmatpush1.xpose.msra.mxu0 0.0
        %948 = vmatprep.subr.mxu0 0.0
        %949 = vmatpush1.xpose.msra.mxu0 0.0
        %950 = vmatprep.subr.mxu0 0.0
        %951 = vmatpush1.xpose.msra.mxu0 0.0
        %952 = vmatprep.subr.mxu0 0.0
        %953 = vmatpush1.xpose.msra.mxu0 0.0
        %954 = vmatprep.subr.mxu0 0.0
        %955 = vmatpush1.xpose.msra.mxu0 0.0
        %956 = vmatprep.subr.mxu0 0.0
        %957 = vmatpush1.xpose.msra.mxu0 0.0
        %958 = vmatprep.subr.mxu0 0.0
        %959 = vmatpush1.xpose.msra.mxu0 0.0
        %960 = vmatprep.subr.mxu0 0.0
        %961 = vmatpush1.xpose.msra.mxu0 0.0
        %962 = vmatprep.subr.mxu0 0.0
        %963 = vmatpush1.xpose.msra.mxu0 0.0
        %964 = vmatprep.subr.mxu0 0.0
        %965 = vmatpush1.xpose.msra.mxu0 0.0
        %966 = vmatprep.subr.mxu0 0.0
        %967 = vmatpush1.xpose.msra.mxu0 0.0
        %968 = vmatprep.subr.mxu0 0.0
        %969 = vmatpush1.xpose.msra.mxu0 0.0
        %970 = vmatprep.subr.mxu0 0.0
        %971 = vmatpush1.xpose.msra.mxu0 0.0
        %972 = vmatprep.subr.mxu0 0.0
        %973 = vmatpush1.xpose.msra.mxu0 0.0
        %974 = vmatprep.subr.mxu0 0.0
        %975 = vmatpush1.xpose.msra.mxu0 0.0
        %976 = vmatprep.subr.mxu0 0.0
        %977 = vmatpush1.xpose.msra.mxu0 0.0
        %978 = vmatprep.mubr.f32.mxu0 0.0
        %979 = vmatmul.mubr.f32.gmra.mrb[0].mxu0 %v910
        %v980 = vpop.f32.mrb[0].mxu0
        %v981 = vadd.f32 0.0, %v980
        %v982 = vpop.f32.mrb[0].mxu0
        %983 = vdwg.mxu0
        %v984 = vsel %vm495, %v981, -inf
        %985 = vmax.xlane.f32.xlu0 %v984
        %v986 = vpop.xlane.xlu0 %985
        %v987 = vsub.f32 %v981, %v986
        %v988 = vmul.f32 %v987, 1.442695
        %v989 = vpow.pop %v988
        %v990 = vsel %vm495, %v989, 0.0
        %991 = vadd.xlane.f32.xlu0 %v990
        %v992 = vpop.xlane.xlu0 %991
        %993 = vrot.lane.b32.xlu0 %v406, 56
        %v994 = vpop.permute.xlu0 %993
        %v997 = vsel %vm495, %v989, 0
        %999 = vmatprep.subr.mxu0 0.0
        %1000 = vmatpush1.msra.mxu0 %v994
        %1001 = vmatprep.subr.mxu0 0.0
        %1002 = vmatpush1.msra.mxu0 0.0
        %1003 = vmatprep.subr.mxu0 0.0
        %1004 = vmatpush1.msra.mxu0 0.0
        %1005 = vmatprep.subr.mxu0 0.0
        %1006 = vmatpush1.msra.mxu0 0.0
        %1007 = vmatprep.subr.mxu0 0.0
        %1008 = vmatpush1.msra.mxu0 0.0
        %1009 = vmatprep.subr.mxu0 0.0
        %1010 = vmatpush1.msra.mxu0 0.0
        %1011 = vmatprep.subr.mxu0 0.0
        %1012 = vmatpush1.msra.mxu0 0.0
        %1013 = vmatprep.subr.mxu0 0.0
        %1014 = vmatpush1.msra.mxu0 0.0
        %1015 = vmatprep.subr.mxu0 0.0
        %1016 = vmatpush1.msra.mxu0 0.0
        %1017 = vmatprep.subr.mxu0 0.0
        %1018 = vmatpush1.msra.mxu0 0.0
        %1019 = vmatprep.subr.mxu0 0.0
        %1020 = vmatpush1.msra.mxu0 0.0
        %1021 = vmatprep.subr.mxu0 0.0
        %1022 = vmatpush1.msra.mxu0 0.0
        %1023 = vmatprep.subr.mxu0 0.0
        %1024 = vmatpush1.msra.mxu0 0.0
        %1025 = vmatprep.subr.mxu0 0.0
        %1026 = vmatpush1.msra.mxu0 0.0
        %1027 = vmatprep.subr.mxu0 0.0
        %1028 = vmatpush1.msra.mxu0 0.0
        %1029 = vmatprep.subr.mxu0 0.0
        %1030 = vmatpush1.msra.mxu0 0.0
        %1031 = vmatprep.subr.mxu0 0.0
        %1032 = vmatpush1.msra.mxu0 0.0
        %1033 = vmatprep.subr.mxu0 0.0
        %1034 = vmatpush1.msra.mxu0 0.0
        %1035 = vmatprep.subr.mxu0 0.0
        %1036 = vmatpush1.msra.mxu0 0.0
        %1037 = vmatprep.subr.mxu0 0.0
        %1038 = vmatpush1.msra.mxu0 0.0
        %1039 = vmatprep.subr.mxu0 0.0
        %1040 = vmatpush1.msra.mxu0 0.0
        %1041 = vmatprep.subr.mxu0 0.0
        %1042 = vmatpush1.msra.mxu0 0.0
        %1043 = vmatprep.subr.mxu0 0.0
        %1044 = vmatpush1.msra.mxu0 0.0
        %1045 = vmatprep.subr.mxu0 0.0
        %1046 = vmatpush1.msra.mxu0 0.0
        %1047 = vmatprep.subr.mxu0 0.0
        %1048 = vmatpush1.msra.mxu0 0.0
        %1049 = vmatprep.subr.mxu0 0.0
        %1050 = vmatpush1.msra.mxu0 0.0
        %1051 = vmatprep.subr.mxu0 0.0
        %1052 = vmatpush1.msra.mxu0 0.0
        %1053 = vmatprep.subr.mxu0 0.0
        %1054 = vmatpush1.msra.mxu0 0.0
        %1055 = vmatprep.subr.mxu0 0.0
        %1056 = vmatpush1.msra.mxu0 0.0
        %1057 = vmatprep.subr.mxu0 0.0
        %1058 = vmatpush1.msra.mxu0 0.0
        %1059 = vmatprep.subr.mxu0 0.0
        %1060 = vmatpush1.msra.mxu0 0.0
        %1061 = vmatprep.subr.mxu0 0.0
        %1062 = vmatpush1.msra.mxu0 0.0
        %1063 = vmatprep.mubr.f32.mxu0 0.0
        %1064 = vmatmul.mubr.f32.gmra.mrb[0].mxu0 %v997
        %v1065 = vpop.f32.mrb[0].mxu0
        %v1066 = vadd.f32 0.0, %v1065
        %v1067 = vpop.f32.mrb[0].mxu0
        %1068 = vdwg.mxu0
        %v1069 = vrcp.pop %v992
        %v1070 = vmul.f32 %v1066, %v1069
        %s1071 = scalar_lea.vmem [#allocation7], 8
        %v1072 = vld [vmem:[%s1071] sm:$0xf]
        %v1074 = vsel %vm420, %v1070, 0
        %v1077 = vsel %vm587, %v1072, 0
        %1079 = vmatprep.subr.mxu0 0.0
        %1080 = vmatpush1.msra.mxu0 %v1077
        %1081 = vmatprep.subr.mxu0 0.0
        %1082 = vmatpush1.msra.mxu0 0.0
        %1083 = vmatprep.subr.mxu0 0.0
        %1084 = vmatpush1.msra.mxu0 0.0
        %1085 = vmatprep.subr.mxu0 0.0
        %1086 = vmatpush1.msra.mxu0 0.0
        %1087 = vmatprep.subr.mxu0 0.0
        %1088 = vmatpush1.msra.mxu0 0.0
        %1089 = vmatprep.subr.mxu0 0.0
        %1090 = vmatpush1.msra.mxu0 0.0
        %1091 = vmatprep.subr.mxu0 0.0
        %1092 = vmatpush1.msra.mxu0 0.0
        %1093 = vmatprep.subr.mxu0 0.0
        %1094 = vmatpush1.msra.mxu0 0.0
        %1095 = vmatprep.subr.mxu0 0.0
        %1096 = vmatpush1.msra.mxu0 0.0
        %1097 = vmatprep.subr.mxu0 0.0
        %1098 = vmatpush1.msra.mxu0 0.0
        %1099 = vmatprep.subr.mxu0 0.0
        %1100 = vmatpush1.msra.mxu0 0.0
        %1101 = vmatprep.subr.mxu0 0.0
        %1102 = vmatpush1.msra.mxu0 0.0
        %1103 = vmatprep.subr.mxu0 0.0
        %1104 = vmatpush1.msra.mxu0 0.0
        %1105 = vmatprep.subr.mxu0 0.0
        %1106 = vmatpush1.msra.mxu0 0.0
        %1107 = vmatprep.subr.mxu0 0.0
        %1108 = vmatpush1.msra.mxu0 0.0
        %1109 = vmatprep.subr.mxu0 0.0
        %1110 = vmatpush1.msra.mxu0 0.0
        %1111 = vmatprep.subr.mxu0 0.0
        %1112 = vmatpush1.msra.mxu0 0.0
        %1113 = vmatprep.subr.mxu0 0.0
        %1114 = vmatpush1.msra.mxu0 0.0
        %1115 = vmatprep.subr.mxu0 0.0
        %1116 = vmatpush1.msra.mxu0 0.0
        %1117 = vmatprep.subr.mxu0 0.0
        %1118 = vmatpush1.msra.mxu0 0.0
        %1119 = vmatprep.subr.mxu0 0.0
        %1120 = vmatpush1.msra.mxu0 0.0
        %1121 = vmatprep.subr.mxu0 0.0
        %1122 = vmatpush1.msra.mxu0 0.0
        %1123 = vmatprep.subr.mxu0 0.0
        %1124 = vmatpush1.msra.mxu0 0.0
        %1125 = vmatprep.subr.mxu0 0.0
        %1126 = vmatpush1.msra.mxu0 0.0
        %1127 = vmatprep.subr.mxu0 0.0
        %1128 = vmatpush1.msra.mxu0 0.0
        %1129 = vmatprep.subr.mxu0 0.0
        %1130 = vmatpush1.msra.mxu0 0.0
        %1131 = vmatprep.subr.mxu0 0.0
        %1132 = vmatpush1.msra.mxu0 0.0
        %1133 = vmatprep.subr.mxu0 0.0
        %1134 = vmatpush1.msra.mxu0 0.0
        %1135 = vmatprep.subr.mxu0 0.0
        %1136 = vmatpush1.msra.mxu0 0.0
        %1137 = vmatprep.subr.mxu0 0.0
        %1138 = vmatpush1.msra.mxu0 0.0
        %1139 = vmatprep.subr.mxu0 0.0
        %1140 = vmatpush1.msra.mxu0 0.0
        %1141 = vmatprep.subr.mxu0 0.0
        %1142 = vmatpush1.msra.mxu0 0.0
        %1143 = vmatprep.mubr.f32.mxu0 0.0
        %1144 = vmatmul.mubr.f32.gmra.mrb[0].mxu0 %v1074
        %v1145 = vpop.f32.mrb[0].mxu0
        %v1146 = vadd.f32 0.0, %v1145
        %v1147 = vpop.f32.mrb[0].mxu0
        %1148 = vdwg.mxu0
        %v1149 = vadd.f32 %v905, %v1146
        %1150 = vrot.lane.b32.xlu0 %v406, 116
        %v1151 = vpop.permute.xlu0 %1150
        %1152 = vrot.lane.b32.xlu0 %v406, 84
        %v1153 = vpop.permute.xlu0 %1152
        %v1154 = vsel %vm420, %v1151, 0
        %v1156 = vsel %vm420, %v1153, 0
        %1158 = vmatprep.subr.mxu0 0.0
        %1159 = vmatpush1.xpose.msra.mxu0 %v1156
        %1160 = vmatprep.subr.mxu0 0.0
        %1161 = vmatpush1.xpose.msra.mxu0 0.0
        %1162 = vmatprep.subr.mxu0 0.0
        %1163 = vmatpush1.xpose.msra.mxu0 0.0
        %1164 = vmatprep.subr.mxu0 0.0
        %1165 = vmatpush1.xpose.msra.mxu0 0.0
        %1166 = vmatprep.subr.mxu0 0.0
        %1167 = vmatpush1.xpose.msra.mxu0 0.0
        %1168 = vmatprep.subr.mxu0 0.0
        %1169 = vmatpush1.xpose.msra.mxu0 0.0
        %1170 = vmatprep.subr.mxu0 0.0
        %1171 = vmatpush1.xpose.msra.mxu0 0.0
        %1172 = vmatprep.subr.mxu0 0.0
        %1173 = vmatpush1.xpose.msra.mxu0 0.0
        %1174 = vmatprep.subr.mxu0 0.0
        %1175 = vmatpush1.xpose.msra.mxu0 0.0
        %1176 = vmatprep.subr.mxu0 0.0
        %1177 = vmatpush1.xpose.msra.mxu0 0.0
        %1178 = vmatprep.subr.mxu0 0.0
        %1179 = vmatpush1.xpose.msra.mxu0 0.0
        %1180 = vmatprep.subr.mxu0 0.0
        %1181 = vmatpush1.xpose.msra.mxu0 0.0
        %1182 = vmatprep.subr.mxu0 0.0
        %1183 = vmatpush1.xpose.msra.mxu0 0.0
        %1184 = vmatprep.subr.mxu0 0.0
        %1185 = vmatpush1.xpose.msra.mxu0 0.0
        %1186 = vmatprep.subr.mxu0 0.0
        %1187 = vmatpush1.xpose.msra.mxu0 0.0
        %1188 = vmatprep.subr.mxu0 0.0
        %1189 = vmatpush1.xpose.msra.mxu0 0.0
        %1190 = vmatprep.subr.mxu0 0.0
        %1191 = vmatpush1.xpose.msra.mxu0 0.0
        %1192 = vmatprep.subr.mxu0 0.0
        %1193 = vmatpush1.xpose.msra.mxu0 0.0
        %1194 = vmatprep.subr.mxu0 0.0
        %1195 = vmatpush1.xpose.msra.mxu0 0.0
        %1196 = vmatprep.subr.mxu0 0.0
        %1197 = vmatpush1.xpose.msra.mxu0 0.0
        %1198 = vmatprep.subr.mxu0 0.0
        %1199 = vmatpush1.xpose.msra.mxu0 0.0
        %1200 = vmatprep.subr.mxu0 0.0
        %1201 = vmatpush1.xpose.msra.mxu0 0.0
        %1202 = vmatprep.subr.mxu0 0.0
        %1203 = vmatpush1.xpose.msra.mxu0 0.0
        %1204 = vmatprep.subr.mxu0 0.0
        %1205 = vmatpush1.xpose.msra.mxu0 0.0
        %1206 = vmatprep.subr.mxu0 0.0
        %1207 = vmatpush1.xpose.msra.mxu0 0.0
        %1208 = vmatprep.subr.mxu0 0.0
        %1209 = vmatpush1.xpose.msra.mxu0 0.0
        %1210 = vmatprep.subr.mxu0 0.0
        %1211 = vmatpush1.xpose.msra.mxu0 0.0
        %1212 = vmatprep.subr.mxu0 0.0
        %1213 = vmatpush1.xpose.msra.mxu0 0.0
        %1214 = vmatprep.subr.mxu0 0.0
        %1215 = vmatpush1.xpose.msra.mxu0 0.0
        %1216 = vmatprep.subr.mxu0 0.0
        %1217 = vmatpush1.xpose.msra.mxu0 0.0
        %1218 = vmatprep.subr.mxu0 0.0
        %1219 = vmatpush1.xpose.msra.mxu0 0.0
        %1220 = vmatprep.subr.mxu0 0.0
        %1221 = vmatpush1.xpose.msra.mxu0 0.0
        %1222 = vmatprep.mubr.f32.mxu0 0.0
        %1223 = vmatmul.mubr.f32.gmra.mrb[0].mxu0 %v1154
        %v1224 = vpop.f32.mrb[0].mxu0
        %v1225 = vadd.f32 0.0, %v1224
        %v1226 = vpop.f32.mrb[0].mxu0
        %1227 = vdwg.mxu0
        %v1228 = vsel %vm495, %v1225, -inf
        %1229 = vmax.xlane.f32.xlu0 %v1228
        %v1230 = vpop.xlane.xlu0 %1229
        %v1231 = vsub.f32 %v1225, %v1230
        %v1232 = vmul.f32 %v1231, 1.442695
        %v1233 = vpow.pop %v1232
        %v1234 = vsel %vm495, %v1233, 0.0
        %1235 = vadd.xlane.f32.xlu0 %v1234
        %v1236 = vpop.xlane.xlu0 %1235
        %1237 = vrot.lane.b32.xlu0 %v406, 52
        %v1238 = vpop.permute.xlu0 %1237
        %v1241 = vsel %vm495, %v1233, 0
        %1243 = vmatprep.subr.mxu0 0.0
        %1244 = vmatpush1.msra.mxu0 %v1238
        %1245 = vmatprep.subr.mxu0 0.0
        %1246 = vmatpush1.msra.mxu0 0.0
        %1247 = vmatprep.subr.mxu0 0.0
        %1248 = vmatpush1.msra.mxu0 0.0
        %1249 = vmatprep.subr.mxu0 0.0
        %1250 = vmatpush1.msra.mxu0 0.0
        %1251 = vmatprep.subr.mxu0 0.0
        %1252 = vmatpush1.msra.mxu0 0.0
        %1253 = vmatprep.subr.mxu0 0.0
        %1254 = vmatpush1.msra.mxu0 0.0
        %1255 = vmatprep.subr.mxu0 0.0
        %1256 = vmatpush1.msra.mxu0 0.0
        %1257 = vmatprep.subr.mxu0 0.0
        %1258 = vmatpush1.msra.mxu0 0.0
        %1259 = vmatprep.subr.mxu0 0.0
        %1260 = vmatpush1.msra.mxu0 0.0
        %1261 = vmatprep.subr.mxu0 0.0
        %1262 = vmatpush1.msra.mxu0 0.0
        %1263 = vmatprep.subr.mxu0 0.0
        %1264 = vmatpush1.msra.mxu0 0.0
        %1265 = vmatprep.subr.mxu0 0.0
        %1266 = vmatpush1.msra.mxu0 0.0
        %1267 = vmatprep.subr.mxu0 0.0
        %1268 = vmatpush1.msra.mxu0 0.0
        %1269 = vmatprep.subr.mxu0 0.0
        %1270 = vmatpush1.msra.mxu0 0.0
        %1271 = vmatprep.subr.mxu0 0.0
        %1272 = vmatpush1.msra.mxu0 0.0
        %1273 = vmatprep.subr.mxu0 0.0
        %1274 = vmatpush1.msra.mxu0 0.0
        %1275 = vmatprep.subr.mxu0 0.0
        %1276 = vmatpush1.msra.mxu0 0.0
        %1277 = vmatprep.subr.mxu0 0.0
        %1278 = vmatpush1.msra.mxu0 0.0
        %1279 = vmatprep.subr.mxu0 0.0
        %1280 = vmatpush1.msra.mxu0 0.0
        %1281 = vmatprep.subr.mxu0 0.0
        %1282 = vmatpush1.msra.mxu0 0.0
        %1283 = vmatprep.subr.mxu0 0.0
        %1284 = vmatpush1.msra.mxu0 0.0
        %1285 = vmatprep.subr.mxu0 0.0
        %1286 = vmatpush1.msra.mxu0 0.0
        %1287 = vmatprep.subr.mxu0 0.0
        %1288 = vmatpush1.msra.mxu0 0.0
        %1289 = vmatprep.subr.mxu0 0.0
        %1290 = vmatpush1.msra.mxu0 0.0
        %1291 = vmatprep.subr.mxu0 0.0
        %1292 = vmatpush1.msra.mxu0 0.0
        %1293 = vmatprep.subr.mxu0 0.0
        %1294 = vmatpush1.msra.mxu0 0.0
        %1295 = vmatprep.subr.mxu0 0.0
        %1296 = vmatpush1.msra.mxu0 0.0
        %1297 = vmatprep.subr.mxu0 0.0
        %1298 = vmatpush1.msra.mxu0 0.0
        %1299 = vmatprep.subr.mxu0 0.0
        %1300 = vmatpush1.msra.mxu0 0.0
        %1301 = vmatprep.subr.mxu0 0.0
        %1302 = vmatpush1.msra.mxu0 0.0
        %1303 = vmatprep.subr.mxu0 0.0
        %1304 = vmatpush1.msra.mxu0 0.0
        %1305 = vmatprep.subr.mxu0 0.0
        %1306 = vmatpush1.msra.mxu0 0.0
        %1307 = vmatprep.mubr.f32.mxu0 0.0
        %1308 = vmatmul.mubr.f32.gmra.mrb[0].mxu0 %v1241
        %v1309 = vpop.f32.mrb[0].mxu0
        %v1310 = vadd.f32 0.0, %v1309
        %v1311 = vpop.f32.mrb[0].mxu0
        %1312 = vdwg.mxu0
        %v1313 = vrcp.pop %v1236
        %v1314 = vmul.f32 %v1310, %v1313
        %s1315 = scalar_lea.vmem [#allocation7], 12
        %v1316 = vld [vmem:[%s1315] sm:$0xf]
        %v1318 = vsel %vm420, %v1314, 0
        %v1321 = vsel %vm587, %v1316, 0
        %1323 = vmatprep.subr.mxu0 0.0
        %1324 = vmatpush1.msra.mxu0 %v1321
        %1325 = vmatprep.subr.mxu0 0.0
        %1326 = vmatpush1.msra.mxu0 0.0
        %1327 = vmatprep.subr.mxu0 0.0
        %1328 = vmatpush1.msra.mxu0 0.0
        %1329 = vmatprep.subr.mxu0 0.0
        %1330 = vmatpush1.msra.mxu0 0.0
        %1331 = vmatprep.subr.mxu0 0.0
        %1332 = vmatpush1.msra.mxu0 0.0
        %1333 = vmatprep.subr.mxu0 0.0
        %1334 = vmatpush1.msra.mxu0 0.0
        %1335 = vmatprep.subr.mxu0 0.0
        %1336 = vmatpush1.msra.mxu0 0.0
        %1337 = vmatprep.subr.mxu0 0.0
        %1338 = vmatpush1.msra.mxu0 0.0
        %1339 = vmatprep.subr.mxu0 0.0
        %1340 = vmatpush1.msra.mxu0 0.0
        %1341 = vmatprep.subr.mxu0 0.0
        %1342 = vmatpush1.msra.mxu0 0.0
        %1343 = vmatprep.subr.mxu0 0.0
        %1344 = vmatpush1.msra.mxu0 0.0
        %1345 = vmatprep.subr.mxu0 0.0
        %1346 = vmatpush1.msra.mxu0 0.0
        %1347 = vmatprep.subr.mxu0 0.0
        %1348 = vmatpush1.msra.mxu0 0.0
        %1349 = vmatprep.subr.mxu0 0.0
        %1350 = vmatpush1.msra.mxu0 0.0
        %1351 = vmatprep.subr.mxu0 0.0
        %1352 = vmatpush1.msra.mxu0 0.0
        %1353 = vmatprep.subr.mxu0 0.0
        %1354 = vmatpush1.msra.mxu0 0.0
        %1355 = vmatprep.subr.mxu0 0.0
        %1356 = vmatpush1.msra.mxu0 0.0
        %1357 = vmatprep.subr.mxu0 0.0
        %1358 = vmatpush1.msra.mxu0 0.0
        %1359 = vmatprep.subr.mxu0 0.0
        %1360 = vmatpush1.msra.mxu0 0.0
        %1361 = vmatprep.subr.mxu0 0.0
        %1362 = vmatpush1.msra.mxu0 0.0
        %1363 = vmatprep.subr.mxu0 0.0
        %1364 = vmatpush1.msra.mxu0 0.0
        %1365 = vmatprep.subr.mxu0 0.0
        %1366 = vmatpush1.msra.mxu0 0.0
        %1367 = vmatprep.subr.mxu0 0.0
        %1368 = vmatpush1.msra.mxu0 0.0
        %1369 = vmatprep.subr.mxu0 0.0
        %1370 = vmatpush1.msra.mxu0 0.0
        %1371 = vmatprep.subr.mxu0 0.0
        %1372 = vmatpush1.msra.mxu0 0.0
        %1373 = vmatprep.subr.mxu0 0.0
        %1374 = vmatpush1.msra.mxu0 0.0
        %1375 = vmatprep.subr.mxu0 0.0
        %1376 = vmatpush1.msra.mxu0 0.0
        %1377 = vmatprep.subr.mxu0 0.0
        %1378 = vmatpush1.msra.mxu0 0.0
        %1379 = vmatprep.subr.mxu0 0.0
        %1380 = vmatpush1.msra.mxu0 0.0
        %1381 = vmatprep.subr.mxu0 0.0
        %1382 = vmatpush1.msra.mxu0 0.0
        %1383 = vmatprep.subr.mxu0 0.0
        %1384 = vmatpush1.msra.mxu0 0.0
        %1385 = vmatprep.subr.mxu0 0.0
        %1386 = vmatpush1.msra.mxu0 0.0
        %1387 = vmatprep.mubr.f32.mxu0 0.0
        %1388 = vmatmul.mubr.f32.gmra.mrb[0].mxu0 %v1318
        %v1389 = vpop.f32.mrb[0].mxu0
        %v1390 = vadd.f32 0.0, %v1389
        %v1391 = vpop.f32.mrb[0].mxu0
        %1392 = vdwg.mxu0
        %v1393 = vadd.f32 %v1149, %v1390
        %1394 = vrot.lane.b32.xlu0 %v406, 112
        %v1395 = vpop.permute.xlu0 %1394
        %1396 = vrot.lane.b32.xlu0 %v406, 80
        %v1397 = vpop.permute.xlu0 %1396
        %v1398 = vsel %vm420, %v1395, 0
        %v1400 = vsel %vm420, %v1397, 0
        %1402 = vmatprep.subr.mxu0 0.0
        %1403 = vmatpush1.xpose.msra.mxu0 %v1400
        %1404 = vmatprep.subr.mxu0 0.0
        %1405 = vmatpush1.xpose.msra.mxu0 0.0
        %1406 = vmatprep.subr.mxu0 0.0
        %1407 = vmatpush1.xpose.msra.mxu0 0.0
        %1408 = vmatprep.subr.mxu0 0.0
        %1409 = vmatpush1.xpose.msra.mxu0 0.0
        %1410 = vmatprep.subr.mxu0 0.0
        %1411 = vmatpush1.xpose.msra.mxu0 0.0
        %1412 = vmatprep.subr.mxu0 0.0
        %1413 = vmatpush1.xpose.msra.mxu0 0.0
        %1414 = vmatprep.subr.mxu0 0.0
        %1415 = vmatpush1.xpose.msra.mxu0 0.0
        %1416 = vmatprep.subr.mxu0 0.0
        %1417 = vmatpush1.xpose.msra.mxu0 0.0
        %1418 = vmatprep.subr.mxu0 0.0
        %1419 = vmatpush1.xpose.msra.mxu0 0.0
        %1420 = vmatprep.subr.mxu0 0.0
        %1421 = vmatpush1.xpose.msra.mxu0 0.0
        %1422 = vmatprep.subr.mxu0 0.0
        %1423 = vmatpush1.xpose.msra.mxu0 0.0
        %1424 = vmatprep.subr.mxu0 0.0
        %1425 = vmatpush1.xpose.msra.mxu0 0.0
        %1426 = vmatprep.subr.mxu0 0.0
        %1427 = vmatpush1.xpose.msra.mxu0 0.0
        %1428 = vmatprep.subr.mxu0 0.0
        %1429 = vmatpush1.xpose.msra.mxu0 0.0
        %1430 = vmatprep.subr.mxu0 0.0
        %1431 = vmatpush1.xpose.msra.mxu0 0.0
        %1432 = vmatprep.subr.mxu0 0.0
        %1433 = vmatpush1.xpose.msra.mxu0 0.0
        %1434 = vmatprep.subr.mxu0 0.0
        %1435 = vmatpush1.xpose.msra.mxu0 0.0
        %1436 = vmatprep.subr.mxu0 0.0
        %1437 = vmatpush1.xpose.msra.mxu0 0.0
        %1438 = vmatprep.subr.mxu0 0.0
        %1439 = vmatpush1.xpose.msra.mxu0 0.0
        %1440 = vmatprep.subr.mxu0 0.0
        %1441 = vmatpush1.xpose.msra.mxu0 0.0
        %1442 = vmatprep.subr.mxu0 0.0
        %1443 = vmatpush1.xpose.msra.mxu0 0.0
        %1444 = vmatprep.subr.mxu0 0.0
        %1445 = vmatpush1.xpose.msra.mxu0 0.0
        %1446 = vmatprep.subr.mxu0 0.0
        %1447 = vmatpush1.xpose.msra.mxu0 0.0
        %1448 = vmatprep.subr.mxu0 0.0
        %1449 = vmatpush1.xpose.msra.mxu0 0.0
        %1450 = vmatprep.subr.mxu0 0.0
        %1451 = vmatpush1.xpose.msra.mxu0 0.0
        %1452 = vmatprep.subr.mxu0 0.0
        %1453 = vmatpush1.xpose.msra.mxu0 0.0
        %1454 = vmatprep.subr.mxu0 0.0
        %1455 = vmatpush1.xpose.msra.mxu0 0.0
        %1456 = vmatprep.subr.mxu0 0.0
        %1457 = vmatpush1.xpose.msra.mxu0 0.0
        %1458 = vmatprep.subr.mxu0 0.0
        %1459 = vmatpush1.xpose.msra.mxu0 0.0
        %1460 = vmatprep.subr.mxu0 0.0
        %1461 = vmatpush1.xpose.msra.mxu0 0.0
        %1462 = vmatprep.subr.mxu0 0.0
        %1463 = vmatpush1.xpose.msra.mxu0 0.0
        %1464 = vmatprep.subr.mxu0 0.0
        %1465 = vmatpush1.xpose.msra.mxu0 0.0
        %1466 = vmatprep.mubr.f32.mxu0 0.0
        %1467 = vmatmul.mubr.f32.gmra.mrb[0].mxu0 %v1398
        %v1468 = vpop.f32.mrb[0].mxu0
        %v1469 = vadd.f32 0.0, %v1468
        %v1470 = vpop.f32.mrb[0].mxu0
        %1471 = vdwg.mxu0
        %v1472 = vsel %vm495, %v1469, -inf
        %1473 = vmax.xlane.f32.xlu0 %v1472
        %v1474 = vpop.xlane.xlu0 %1473
        %v1475 = vsub.f32 %v1469, %v1474
        %v1476 = vmul.f32 %v1475, 1.442695
        %v1477 = vpow.pop %v1476
        %v1478 = vsel %vm495, %v1477, 0.0
        %1479 = vadd.xlane.f32.xlu0 %v1478
        %v1480 = vpop.xlane.xlu0 %1479
        %1481 = vrot.lane.b32.xlu0 %v406, 48
        %v1482 = vpop.permute.xlu0 %1481
        %v1485 = vsel %vm495, %v1477, 0
        %1487 = vmatprep.subr.mxu0 0.0
        %1488 = vmatpush1.msra.mxu0 %v1482
        %1489 = vmatprep.subr.mxu0 0.0
        %1490 = vmatpush1.msra.mxu0 0.0
        %1491 = vmatprep.subr.mxu0 0.0
        %1492 = vmatpush1.msra.mxu0 0.0
        %1493 = vmatprep.subr.mxu0 0.0
        %1494 = vmatpush1.msra.mxu0 0.0
        %1495 = vmatprep.subr.mxu0 0.0
        %1496 = vmatpush1.msra.mxu0 0.0
        %1497 = vmatprep.subr.mxu0 0.0
        %1498 = vmatpush1.msra.mxu0 0.0
        %1499 = vmatprep.subr.mxu0 0.0
        %1500 = vmatpush1.msra.mxu0 0.0
        %1501 = vmatprep.subr.mxu0 0.0
        %1502 = vmatpush1.msra.mxu0 0.0
        %1503 = vmatprep.subr.mxu0 0.0
        %1504 = vmatpush1.msra.mxu0 0.0
        %1505 = vmatprep.subr.mxu0 0.0
        %1506 = vmatpush1.msra.mxu0 0.0
        %1507 = vmatprep.subr.mxu0 0.0
        %1508 = vmatpush1.msra.mxu0 0.0
        %1509 = vmatprep.subr.mxu0 0.0
        %1510 = vmatpush1.msra.mxu0 0.0
        %1511 = vmatprep.subr.mxu0 0.0
        %1512 = vmatpush1.msra.mxu0 0.0
        %1513 = vmatprep.subr.mxu0 0.0
        %1514 = vmatpush1.msra.mxu0 0.0
        %1515 = vmatprep.subr.mxu0 0.0
        %1516 = vmatpush1.msra.mxu0 0.0
        %1517 = vmatprep.subr.mxu0 0.0
        %1518 = vmatpush1.msra.mxu0 0.0
        %1519 = vmatprep.subr.mxu0 0.0
        %1520 = vmatpush1.msra.mxu0 0.0
        %1521 = vmatprep.subr.mxu0 0.0
        %1522 = vmatpush1.msra.mxu0 0.0
        %1523 = vmatprep.subr.mxu0 0.0
        %1524 = vmatpush1.msra.mxu0 0.0
        %1525 = vmatprep.subr.mxu0 0.0
        %1526 = vmatpush1.msra.mxu0 0.0
        %1527 = vmatprep.subr.mxu0 0.0
        %1528 = vmatpush1.msra.mxu0 0.0
        %1529 = vmatprep.subr.mxu0 0.0
        %1530 = vmatpush1.msra.mxu0 0.0
        %1531 = vmatprep.subr.mxu0 0.0
        %1532 = vmatpush1.msra.mxu0 0.0
        %1533 = vmatprep.subr.mxu0 0.0
        %1534 = vmatpush1.msra.mxu0 0.0
        %1535 = vmatprep.subr.mxu0 0.0
        %1536 = vmatpush1.msra.mxu0 0.0
        %1537 = vmatprep.subr.mxu0 0.0
        %1538 = vmatpush1.msra.mxu0 0.0
        %1539 = vmatprep.subr.mxu0 0.0
        %1540 = vmatpush1.msra.mxu0 0.0
        %1541 = vmatprep.subr.mxu0 0.0
        %1542 = vmatpush1.msra.mxu0 0.0
        %1543 = vmatprep.subr.mxu0 0.0
        %1544 = vmatpush1.msra.mxu0 0.0
        %1545 = vmatprep.subr.mxu0 0.0
        %1546 = vmatpush1.msra.mxu0 0.0
        %1547 = vmatprep.subr.mxu0 0.0
        %1548 = vmatpush1.msra.mxu0 0.0
        %1549 = vmatprep.subr.mxu0 0.0
        %1550 = vmatpush1.msra.mxu0 0.0
        %1551 = vmatprep.mubr.f32.mxu0 0.0
        %1552 = vmatmul.mubr.f32.gmra.mrb[0].mxu0 %v1485
        %v1553 = vpop.f32.mrb[0].mxu0
        %v1554 = vadd.f32 0.0, %v1553
        %v1555 = vpop.f32.mrb[0].mxu0
        %1556 = vdwg.mxu0
        %v1557 = vrcp.pop %v1480
        %v1558 = vmul.f32 %v1554, %v1557
        %s1559 = scalar_lea.vmem [#allocation7], 16
        %v1560 = vld [vmem:[%s1559] sm:$0xf]
        %v1562 = vsel %vm420, %v1558, 0
        %v1565 = vsel %vm587, %v1560, 0
        %1567 = vmatprep.subr.mxu0 0.0
        %1568 = vmatpush1.msra.mxu0 %v1565
        %1569 = vmatprep.subr.mxu0 0.0
        %1570 = vmatpush1.msra.mxu0 0.0
        %1571 = vmatprep.subr.mxu0 0.0
        %1572 = vmatpush1.msra.mxu0 0.0
        %1573 = vmatprep.subr.mxu0 0.0
        %1574 = vmatpush1.msra.mxu0 0.0
        %1575 = vmatprep.subr.mxu0 0.0
        %1576 = vmatpush1.msra.mxu0 0.0
        %1577 = vmatprep.subr.mxu0 0.0
        %1578 = vmatpush1.msra.mxu0 0.0
        %1579 = vmatprep.subr.mxu0 0.0
        %1580 = vmatpush1.msra.mxu0 0.0
        %1581 = vmatprep.subr.mxu0 0.0
        %1582 = vmatpush1.msra.mxu0 0.0
        %1583 = vmatprep.subr.mxu0 0.0
        %1584 = vmatpush1.msra.mxu0 0.0
        %1585 = vmatprep.subr.mxu0 0.0
        %1586 = vmatpush1.msra.mxu0 0.0
        %1587 = vmatprep.subr.mxu0 0.0
        %1588 = vmatpush1.msra.mxu0 0.0
        %1589 = vmatprep.subr.mxu0 0.0
        %1590 = vmatpush1.msra.mxu0 0.0
        %1591 = vmatprep.subr.mxu0 0.0
        %1592 = vmatpush1.msra.mxu0 0.0
        %1593 = vmatprep.subr.mxu0 0.0
        %1594 = vmatpush1.msra.mxu0 0.0
        %1595 = vmatprep.subr.mxu0 0.0
        %1596 = vmatpush1.msra.mxu0 0.0
        %1597 = vmatprep.subr.mxu0 0.0
        %1598 = vmatpush1.msra.mxu0 0.0
        %1599 = vmatprep.subr.mxu0 0.0
        %1600 = vmatpush1.msra.mxu0 0.0
        %1601 = vmatprep.subr.mxu0 0.0
        %1602 = vmatpush1.msra.mxu0 0.0
        %1603 = vmatprep.subr.mxu0 0.0
        %1604 = vmatpush1.msra.mxu0 0.0
        %1605 = vmatprep.subr.mxu0 0.0
        %1606 = vmatpush1.msra.mxu0 0.0
        %1607 = vmatprep.subr.mxu0 0.0
        %1608 = vmatpush1.msra.mxu0 0.0
        %1609 = vmatprep.subr.mxu0 0.0
        %1610 = vmatpush1.msra.mxu0 0.0
        %1611 = vmatprep.subr.mxu0 0.0
        %1612 = vmatpush1.msra.mxu0 0.0
        %1613 = vmatprep.subr.mxu0 0.0
        %1614 = vmatpush1.msra.mxu0 0.0
        %1615 = vmatprep.subr.mxu0 0.0
        %1616 = vmatpush1.msra.mxu0 0.0
        %1617 = vmatprep.subr.mxu0 0.0
        %1618 = vmatpush1.msra.mxu0 0.0
        %1619 = vmatprep.subr.mxu0 0.0
        %1620 = vmatpush1.msra.mxu0 0.0
        %1621 = vmatprep.subr.mxu0 0.0
        %1622 = vmatpush1.msra.mxu0 0.0
        %1623 = vmatprep.subr.mxu0 0.0
        %1624 = vmatpush1.msra.mxu0 0.0
        %1625 = vmatprep.subr.mxu0 0.0
        %1626 = vmatpush1.msra.mxu0 0.0
        %1627 = vmatprep.subr.mxu0 0.0
        %1628 = vmatpush1.msra.mxu0 0.0
        %1629 = vmatprep.subr.mxu0 0.0
        %1630 = vmatpush1.msra.mxu0 0.0
        %1631 = vmatprep.mubr.f32.mxu0 0.0
        %1632 = vmatmul.mubr.f32.gmra.mrb[0].mxu0 %v1562
        %v1633 = vpop.f32.mrb[0].mxu0
        %v1634 = vadd.f32 0.0, %v1633
        %v1635 = vpop.f32.mrb[0].mxu0
        %1636 = vdwg.mxu0
        %v1637 = vadd.f32 %v1393, %v1634
        %1638 = vrot.lane.b32.xlu0 %v406, 108
        %v1639 = vpop.permute.xlu0 %1638
        %1640 = vrot.lane.b32.xlu0 %v406, 76
        %v1641 = vpop.permute.xlu0 %1640
        %v1642 = vsel %vm420, %v1639, 0
        %v1644 = vsel %vm420, %v1641, 0
        %1646 = vmatprep.subr.mxu0 0.0
        %1647 = vmatpush1.xpose.msra.mxu0 %v1644
        %1648 = vmatprep.subr.mxu0 0.0
        %1649 = vmatpush1.xpose.msra.mxu0 0.0
        %1650 = vmatprep.subr.mxu0 0.0
        %1651 = vmatpush1.xpose.msra.mxu0 0.0
        %1652 = vmatprep.subr.mxu0 0.0
        %1653 = vmatpush1.xpose.msra.mxu0 0.0
        %1654 = vmatprep.subr.mxu0 0.0
        %1655 = vmatpush1.xpose.msra.mxu0 0.0
        %1656 = vmatprep.subr.mxu0 0.0
        %1657 = vmatpush1.xpose.msra.mxu0 0.0
        %1658 = vmatprep.subr.mxu0 0.0
        %1659 = vmatpush1.xpose.msra.mxu0 0.0
        %1660 = vmatprep.subr.mxu0 0.0
        %1661 = vmatpush1.xpose.msra.mxu0 0.0
        %1662 = vmatprep.subr.mxu0 0.0
        %1663 = vmatpush1.xpose.msra.mxu0 0.0
        %1664 = vmatprep.subr.mxu0 0.0
        %1665 = vmatpush1.xpose.msra.mxu0 0.0
        %1666 = vmatprep.subr.mxu0 0.0
        %1667 = vmatpush1.xpose.msra.mxu0 0.0
        %1668 = vmatprep.subr.mxu0 0.0
        %1669 = vmatpush1.xpose.msra.mxu0 0.0
        %1670 = vmatprep.subr.mxu0 0.0
        %1671 = vmatpush1.xpose.msra.mxu0 0.0
        %1672 = vmatprep.subr.mxu0 0.0
        %1673 = vmatpush1.xpose.msra.mxu0 0.0
        %1674 = vmatprep.subr.mxu0 0.0
        %1675 = vmatpush1.xpose.msra.mxu0 0.0
        %1676 = vmatprep.subr.mxu0 0.0
        %1677 = vmatpush1.xpose.msra.mxu0 0.0
        %1678 = vmatprep.subr.mxu0 0.0
        %1679 = vmatpush1.xpose.msra.mxu0 0.0
        %1680 = vmatprep.subr.mxu0 0.0
        %1681 = vmatpush1.xpose.msra.mxu0 0.0
        %1682 = vmatprep.subr.mxu0 0.0
        %1683 = vmatpush1.xpose.msra.mxu0 0.0
        %1684 = vmatprep.subr.mxu0 0.0
        %1685 = vmatpush1.xpose.msra.mxu0 0.0
        %1686 = vmatprep.subr.mxu0 0.0
        %1687 = vmatpush1.xpose.msra.mxu0 0.0
        %1688 = vmatprep.subr.mxu0 0.0
        %1689 = vmatpush1.xpose.msra.mxu0 0.0
        %1690 = vmatprep.subr.mxu0 0.0
        %1691 = vmatpush1.xpose.msra.mxu0 0.0
        %1692 = vmatprep.subr.mxu0 0.0
        %1693 = vmatpush1.xpose.msra.mxu0 0.0
        %1694 = vmatprep.subr.mxu0 0.0
        %1695 = vmatpush1.xpose.msra.mxu0 0.0
        %1696 = vmatprep.subr.mxu0 0.0
        %1697 = vmatpush1.xpose.msra.mxu0 0.0
        %1698 = vmatprep.subr.mxu0 0.0
        %1699 = vmatpush1.xpose.msra.mxu0 0.0
        %1700 = vmatprep.subr.mxu0 0.0
        %1701 = vmatpush1.xpose.msra.mxu0 0.0
        %1702 = vmatprep.subr.mxu0 0.0
        %1703 = vmatpush1.xpose.msra.mxu0 0.0
        %1704 = vmatprep.subr.mxu0 0.0
        %1705 = vmatpush1.xpose.msra.mxu0 0.0
        %1706 = vmatprep.subr.mxu0 0.0
        %1707 = vmatpush1.xpose.msra.mxu0 0.0
        %1708 = vmatprep.subr.mxu0 0.0
        %1709 = vmatpush1.xpose.msra.mxu0 0.0
        %1710 = vmatprep.mubr.f32.mxu0 0.0
        %1711 = vmatmul.mubr.f32.gmra.mrb[0].mxu0 %v1642
        %v1712 = vpop.f32.mrb[0].mxu0
        %v1713 = vadd.f32 0.0, %v1712
        %v1714 = vpop.f32.mrb[0].mxu0
        %1715 = vdwg.mxu0
        %v1716 = vsel %vm495, %v1713, -inf
        %1717 = vmax.xlane.f32.xlu0 %v1716
        %v1718 = vpop.xlane.xlu0 %1717
        %v1719 = vsub.f32 %v1713, %v1718
        %v1720 = vmul.f32 %v1719, 1.442695
        %v1721 = vpow.pop %v1720
        %v1722 = vsel %vm495, %v1721, 0.0
        %1723 = vadd.xlane.f32.xlu0 %v1722
        %v1724 = vpop.xlane.xlu0 %1723
        %1725 = vrot.lane.b32.xlu0 %v406, 44
        %v1726 = vpop.permute.xlu0 %1725
        %v1729 = vsel %vm495, %v1721, 0
        %1731 = vmatprep.subr.mxu0 0.0
        %1732 = vmatpush1.msra.mxu0 %v1726
        %1733 = vmatprep.subr.mxu0 0.0
        %1734 = vmatpush1.msra.mxu0 0.0
        %1735 = vmatprep.subr.mxu0 0.0
        %1736 = vmatpush1.msra.mxu0 0.0
        %1737 = vmatprep.subr.mxu0 0.0
        %1738 = vmatpush1.msra.mxu0 0.0
        %1739 = vmatprep.subr.mxu0 0.0
        %1740 = vmatpush1.msra.mxu0 0.0
        %1741 = vmatprep.subr.mxu0 0.0
        %1742 = vmatpush1.msra.mxu0 0.0
        %1743 = vmatprep.subr.mxu0 0.0
        %1744 = vmatpush1.msra.mxu0 0.0
        %1745 = vmatprep.subr.mxu0 0.0
        %1746 = vmatpush1.msra.mxu0 0.0
        %1747 = vmatprep.subr.mxu0 0.0
        %1748 = vmatpush1.msra.mxu0 0.0
        %1749 = vmatprep.subr.mxu0 0.0
        %1750 = vmatpush1.msra.mxu0 0.0
        %1751 = vmatprep.subr.mxu0 0.0
        %1752 = vmatpush1.msra.mxu0 0.0
        %1753 = vmatprep.subr.mxu0 0.0
        %1754 = vmatpush1.msra.mxu0 0.0
        %1755 = vmatprep.subr.mxu0 0.0
        %1756 = vmatpush1.msra.mxu0 0.0
        %1757 = vmatprep.subr.mxu0 0.0
        %1758 = vmatpush1.msra.mxu0 0.0
        %1759 = vmatprep.subr.mxu0 0.0
        %1760 = vmatpush1.msra.mxu0 0.0
        %1761 = vmatprep.subr.mxu0 0.0
        %1762 = vmatpush1.msra.mxu0 0.0
        %1763 = vmatprep.subr.mxu0 0.0
        %1764 = vmatpush1.msra.mxu0 0.0
        %1765 = vmatprep.subr.mxu0 0.0
        %1766 = vmatpush1.msra.mxu0 0.0
        %1767 = vmatprep.subr.mxu0 0.0
        %1768 = vmatpush1.msra.mxu0 0.0
        %1769 = vmatprep.subr.mxu0 0.0
        %1770 = vmatpush1.msra.mxu0 0.0
        %1771 = vmatprep.subr.mxu0 0.0
        %1772 = vmatpush1.msra.mxu0 0.0
        %1773 = vmatprep.subr.mxu0 0.0
        %1774 = vmatpush1.msra.mxu0 0.0
        %1775 = vmatprep.subr.mxu0 0.0
        %1776 = vmatpush1.msra.mxu0 0.0
        %1777 = vmatprep.subr.mxu0 0.0
        %1778 = vmatpush1.msra.mxu0 0.0
        %1779 = vmatprep.subr.mxu0 0.0
        %1780 = vmatpush1.msra.mxu0 0.0
        %1781 = vmatprep.subr.mxu0 0.0
        %1782 = vmatpush1.msra.mxu0 0.0
        %1783 = vmatprep.subr.mxu0 0.0
        %1784 = vmatpush1.msra.mxu0 0.0
        %1785 = vmatprep.subr.mxu0 0.0
        %1786 = vmatpush1.msra.mxu0 0.0
        %1787 = vmatprep.subr.mxu0 0.0
        %1788 = vmatpush1.msra.mxu0 0.0
        %1789 = vmatprep.subr.mxu0 0.0
        %1790 = vmatpush1.msra.mxu0 0.0
        %1791 = vmatprep.subr.mxu0 0.0
        %1792 = vmatpush1.msra.mxu0 0.0
        %1793 = vmatprep.subr.mxu0 0.0
        %1794 = vmatpush1.msra.mxu0 0.0
        %1795 = vmatprep.mubr.f32.mxu0 0.0
        %1796 = vmatmul.mubr.f32.gmra.mrb[0].mxu0 %v1729
        %v1797 = vpop.f32.mrb[0].mxu0
        %v1798 = vadd.f32 0.0, %v1797
        %v1799 = vpop.f32.mrb[0].mxu0
        %1800 = vdwg.mxu0
        %v1801 = vrcp.pop %v1724
        %v1802 = vmul.f32 %v1798, %v1801
        %s1803 = scalar_lea.vmem [#allocation7], 20
        %v1804 = vld [vmem:[%s1803] sm:$0xf]
        %v1806 = vsel %vm420, %v1802, 0
        %v1809 = vsel %vm587, %v1804, 0
        %1811 = vmatprep.subr.mxu0 0.0
        %1812 = vmatpush1.msra.mxu0 %v1809
        %1813 = vmatprep.subr.mxu0 0.0
        %1814 = vmatpush1.msra.mxu0 0.0
        %1815 = vmatprep.subr.mxu0 0.0
        %1816 = vmatpush1.msra.mxu0 0.0
        %1817 = vmatprep.subr.mxu0 0.0
        %1818 = vmatpush1.msra.mxu0 0.0
        %1819 = vmatprep.subr.mxu0 0.0
        %1820 = vmatpush1.msra.mxu0 0.0
        %1821 = vmatprep.subr.mxu0 0.0
        %1822 = vmatpush1.msra.mxu0 0.0
        %1823 = vmatprep.subr.mxu0 0.0
        %1824 = vmatpush1.msra.mxu0 0.0
        %1825 = vmatprep.subr.mxu0 0.0
        %1826 = vmatpush1.msra.mxu0 0.0
        %1827 = vmatprep.subr.mxu0 0.0
        %1828 = vmatpush1.msra.mxu0 0.0
        %1829 = vmatprep.subr.mxu0 0.0
        %1830 = vmatpush1.msra.mxu0 0.0
        %1831 = vmatprep.subr.mxu0 0.0
        %1832 = vmatpush1.msra.mxu0 0.0
        %1833 = vmatprep.subr.mxu0 0.0
        %1834 = vmatpush1.msra.mxu0 0.0
        %1835 = vmatprep.subr.mxu0 0.0
        %1836 = vmatpush1.msra.mxu0 0.0
        %1837 = vmatprep.subr.mxu0 0.0
        %1838 = vmatpush1.msra.mxu0 0.0
        %1839 = vmatprep.subr.mxu0 0.0
        %1840 = vmatpush1.msra.mxu0 0.0
        %1841 = vmatprep.subr.mxu0 0.0
        %1842 = vmatpush1.msra.mxu0 0.0
        %1843 = vmatprep.subr.mxu0 0.0
        %1844 = vmatpush1.msra.mxu0 0.0
        %1845 = vmatprep.subr.mxu0 0.0
        %1846 = vmatpush1.msra.mxu0 0.0
        %1847 = vmatprep.subr.mxu0 0.0
        %1848 = vmatpush1.msra.mxu0 0.0
        %1849 = vmatprep.subr.mxu0 0.0
        %1850 = vmatpush1.msra.mxu0 0.0
        %1851 = vmatprep.subr.mxu0 0.0
        %1852 = vmatpush1.msra.mxu0 0.0
        %1853 = vmatprep.subr.mxu0 0.0
        %1854 = vmatpush1.msra.mxu0 0.0
        %1855 = vmatprep.subr.mxu0 0.0
        %1856 = vmatpush1.msra.mxu0 0.0
        %1857 = vmatprep.subr.mxu0 0.0
        %1858 = vmatpush1.msra.mxu0 0.0
        %1859 = vmatprep.subr.mxu0 0.0
        %1860 = vmatpush1.msra.mxu0 0.0
        %1861 = vmatprep.subr.mxu0 0.0
        %1862 = vmatpush1.msra.mxu0 0.0
        %1863 = vmatprep.subr.mxu0 0.0
        %1864 = vmatpush1.msra.mxu0 0.0
        %1865 = vmatprep.subr.mxu0 0.0
        %1866 = vmatpush1.msra.mxu0 0.0
        %1867 = vmatprep.subr.mxu0 0.0
        %1868 = vmatpush1.msra.mxu0 0.0
        %1869 = vmatprep.subr.mxu0 0.0
        %1870 = vmatpush1.msra.mxu0 0.0
        %1871 = vmatprep.subr.mxu0 0.0
        %1872 = vmatpush1.msra.mxu0 0.0
        %1873 = vmatprep.subr.mxu0 0.0
        %1874 = vmatpush1.msra.mxu0 0.0
        %1875 = vmatprep.mubr.f32.mxu0 0.0
        %1876 = vmatmul.mubr.f32.gmra.mrb[0].mxu0 %v1806
        %v1877 = vpop.f32.mrb[0].mxu0
        %v1878 = vadd.f32 0.0, %v1877
        %v1879 = vpop.f32.mrb[0].mxu0
        %1880 = vdwg.mxu0
        %v1881 = vadd.f32 %v1637, %v1878
        %1882 = vrot.lane.b32.xlu0 %v406, 104
        %v1883 = vpop.permute.xlu0 %1882
        %1884 = vrot.lane.b32.xlu0 %v406, 72
        %v1885 = vpop.permute.xlu0 %1884
        %v1886 = vsel %vm420, %v1883, 0
        %v1888 = vsel %vm420, %v1885, 0
        %1890 = vmatprep.subr.mxu0 0.0
        %1891 = vmatpush1.xpose.msra.mxu0 %v1888
        %1892 = vmatprep.subr.mxu0 0.0
        %1893 = vmatpush1.xpose.msra.mxu0 0.0
        %1894 = vmatprep.subr.mxu0 0.0
        %1895 = vmatpush1.xpose.msra.mxu0 0.0
        %1896 = vmatprep.subr.mxu0 0.0
        %1897 = vmatpush1.xpose.msra.mxu0 0.0
        %1898 = vmatprep.subr.mxu0 0.0
        %1899 = vmatpush1.xpose.msra.mxu0 0.0
        %1900 = vmatprep.subr.mxu0 0.0
        %1901 = vmatpush1.xpose.msra.mxu0 0.0
        %1902 = vmatprep.subr.mxu0 0.0
        %1903 = vmatpush1.xpose.msra.mxu0 0.0
        %1904 = vmatprep.subr.mxu0 0.0
        %1905 = vmatpush1.xpose.msra.mxu0 0.0
        %1906 = vmatprep.subr.mxu0 0.0
        %1907 = vmatpush1.xpose.msra.mxu0 0.0
        %1908 = vmatprep.subr.mxu0 0.0
        %1909 = vmatpush1.xpose.msra.mxu0 0.0
        %1910 = vmatprep.subr.mxu0 0.0
        %1911 = vmatpush1.xpose.msra.mxu0 0.0
        %1912 = vmatprep.subr.mxu0 0.0
        %1913 = vmatpush1.xpose.msra.mxu0 0.0
        %1914 = vmatprep.subr.mxu0 0.0
        %1915 = vmatpush1.xpose.msra.mxu0 0.0
        %1916 = vmatprep.subr.mxu0 0.0
        %1917 = vmatpush1.xpose.msra.mxu0 0.0
        %1918 = vmatprep.subr.mxu0 0.0
        %1919 = vmatpush1.xpose.msra.mxu0 0.0
        %1920 = vmatprep.subr.mxu0 0.0
        %1921 = vmatpush1.xpose.msra.mxu0 0.0
        %1922 = vmatprep.subr.mxu0 0.0
        %1923 = vmatpush1.xpose.msra.mxu0 0.0
        %1924 = vmatprep.subr.mxu0 0.0
        %1925 = vmatpush1.xpose.msra.mxu0 0.0
        %1926 = vmatprep.subr.mxu0 0.0
        %1927 = vmatpush1.xpose.msra.mxu0 0.0
        %1928 = vmatprep.subr.mxu0 0.0
        %1929 = vmatpush1.xpose.msra.mxu0 0.0
        %1930 = vmatprep.subr.mxu0 0.0
        %1931 = vmatpush1.xpose.msra.mxu0 0.0
        %1932 = vmatprep.subr.mxu0 0.0
        %1933 = vmatpush1.xpose.msra.mxu0 0.0
        %1934 = vmatprep.subr.mxu0 0.0
        %1935 = vmatpush1.xpose.msra.mxu0 0.0
        %1936 = vmatprep.subr.mxu0 0.0
        %1937 = vmatpush1.xpose.msra.mxu0 0.0
        %1938 = vmatprep.subr.mxu0 0.0
        %1939 = vmatpush1.xpose.msra.mxu0 0.0
        %1940 = vmatprep.subr.mxu0 0.0
        %1941 = vmatpush1.xpose.msra.mxu0 0.0
        %1942 = vmatprep.subr.mxu0 0.0
        %1943 = vmatpush1.xpose.msra.mxu0 0.0
        %1944 = vmatprep.subr.mxu0 0.0
        %1945 = vmatpush1.xpose.msra.mxu0 0.0
        %1946 = vmatprep.subr.mxu0 0.0
        %1947 = vmatpush1.xpose.msra.mxu0 0.0
        %1948 = vmatprep.subr.mxu0 0.0
        %1949 = vmatpush1.xpose.msra.mxu0 0.0
        %1950 = vmatprep.subr.mxu0 0.0
        %1951 = vmatpush1.xpose.msra.mxu0 0.0
        %1952 = vmatprep.subr.mxu0 0.0
        %1953 = vmatpush1.xpose.msra.mxu0 0.0
        %1954 = vmatprep.mubr.f32.mxu0 0.0
        %1955 = vmatmul.mubr.f32.gmra.mrb[0].mxu0 %v1886
        %v1956 = vpop.f32.mrb[0].mxu0
        %v1957 = vadd.f32 0.0, %v1956
        %v1958 = vpop.f32.mrb[0].mxu0
        %1959 = vdwg.mxu0
        %v1960 = vsel %vm495, %v1957, -inf
        %1961 = vmax.xlane.f32.xlu0 %v1960
        %v1962 = vpop.xlane.xlu0 %1961
        %v1963 = vsub.f32 %v1957, %v1962
        %v1964 = vmul.f32 %v1963, 1.442695
        %v1965 = vpow.pop %v1964
        %v1966 = vsel %vm495, %v1965, 0.0
        %1967 = vadd.xlane.f32.xlu0 %v1966
        %v1968 = vpop.xlane.xlu0 %1967
        %1969 = vrot.lane.b32.xlu0 %v406, 40
        %v1970 = vpop.permute.xlu0 %1969
        %v1973 = vsel %vm495, %v1965, 0
        %1975 = vmatprep.subr.mxu0 0.0
        %1976 = vmatpush1.msra.mxu0 %v1970
        %1977 = vmatprep.subr.mxu0 0.0
        %1978 = vmatpush1.msra.mxu0 0.0
        %1979 = vmatprep.subr.mxu0 0.0
        %1980 = vmatpush1.msra.mxu0 0.0
        %1981 = vmatprep.subr.mxu0 0.0
        %1982 = vmatpush1.msra.mxu0 0.0
        %1983 = vmatprep.subr.mxu0 0.0
        %1984 = vmatpush1.msra.mxu0 0.0
        %1985 = vmatprep.subr.mxu0 0.0
        %1986 = vmatpush1.msra.mxu0 0.0
        %1987 = vmatprep.subr.mxu0 0.0
        %1988 = vmatpush1.msra.mxu0 0.0
        %1989 = vmatprep.subr.mxu0 0.0
        %1990 = vmatpush1.msra.mxu0 0.0
        %1991 = vmatprep.subr.mxu0 0.0
        %1992 = vmatpush1.msra.mxu0 0.0
        %1993 = vmatprep.subr.mxu0 0.0
        %1994 = vmatpush1.msra.mxu0 0.0
        %1995 = vmatprep.subr.mxu0 0.0
        %1996 = vmatpush1.msra.mxu0 0.0
        %1997 = vmatprep.subr.mxu0 0.0
        %1998 = vmatpush1.msra.mxu0 0.0
        %1999 = vmatprep.subr.mxu0 0.0
        %2000 = vmatpush1.msra.mxu0 0.0
        %2001 = vmatprep.subr.mxu0 0.0
        %2002 = vmatpush1.msra.mxu0 0.0
        %2003 = vmatprep.subr.mxu0 0.0
        %2004 = vmatpush1.msra.mxu0 0.0
        %2005 = vmatprep.subr.mxu0 0.0
        %2006 = vmatpush1.msra.mxu0 0.0
        %2007 = vmatprep.subr.mxu0 0.0
        %2008 = vmatpush1.msra.mxu0 0.0
        %2009 = vmatprep.subr.mxu0 0.0
        %2010 = vmatpush1.msra.mxu0 0.0
        %2011 = vmatprep.subr.mxu0 0.0
        %2012 = vmatpush1.msra.mxu0 0.0
        %2013 = vmatprep.subr.mxu0 0.0
        %2014 = vmatpush1.msra.mxu0 0.0
        %2015 = vmatprep.subr.mxu0 0.0
        %2016 = vmatpush1.msra.mxu0 0.0
        %2017 = vmatprep.subr.mxu0 0.0
        %2018 = vmatpush1.msra.mxu0 0.0
        %2019 = vmatprep.subr.mxu0 0.0
        %2020 = vmatpush1.msra.mxu0 0.0
        %2021 = vmatprep.subr.mxu0 0.0
        %2022 = vmatpush1.msra.mxu0 0.0
        %2023 = vmatprep.subr.mxu0 0.0
        %2024 = vmatpush1.msra.mxu0 0.0
        %2025 = vmatprep.subr.mxu0 0.0
        %2026 = vmatpush1.msra.mxu0 0.0
        %2027 = vmatprep.subr.mxu0 0.0
        %2028 = vmatpush1.msra.mxu0 0.0
        %2029 = vmatprep.subr.mxu0 0.0
        %2030 = vmatpush1.msra.mxu0 0.0
        %2031 = vmatprep.subr.mxu0 0.0
        %2032 = vmatpush1.msra.mxu0 0.0
        %2033 = vmatprep.subr.mxu0 0.0
        %2034 = vmatpush1.msra.mxu0 0.0
        %2035 = vmatprep.subr.mxu0 0.0
        %2036 = vmatpush1.msra.mxu0 0.0
        %2037 = vmatprep.subr.mxu0 0.0
        %2038 = vmatpush1.msra.mxu0 0.0
        %2039 = vmatprep.mubr.f32.mxu0 0.0
        %2040 = vmatmul.mubr.f32.gmra.mrb[0].mxu0 %v1973
        %v2041 = vpop.f32.mrb[0].mxu0
        %v2042 = vadd.f32 0.0, %v2041
        %v2043 = vpop.f32.mrb[0].mxu0
        %2044 = vdwg.mxu0
        %v2045 = vrcp.pop %v1968
        %v2046 = vmul.f32 %v2042, %v2045
        %s2047 = scalar_lea.vmem [#allocation7], 24
        %v2048 = vld [vmem:[%s2047] sm:$0xf]
        %v2050 = vsel %vm420, %v2046, 0
        %v2053 = vsel %vm587, %v2048, 0
        %2055 = vmatprep.subr.mxu0 0.0
        %2056 = vmatpush1.msra.mxu0 %v2053
        %2057 = vmatprep.subr.mxu0 0.0
        %2058 = vmatpush1.msra.mxu0 0.0
        %2059 = vmatprep.subr.mxu0 0.0
        %2060 = vmatpush1.msra.mxu0 0.0
        %2061 = vmatprep.subr.mxu0 0.0
        %2062 = vmatpush1.msra.mxu0 0.0
        %2063 = vmatprep.subr.mxu0 0.0
        %2064 = vmatpush1.msra.mxu0 0.0
        %2065 = vmatprep.subr.mxu0 0.0
        %2066 = vmatpush1.msra.mxu0 0.0
        %2067 = vmatprep.subr.mxu0 0.0
        %2068 = vmatpush1.msra.mxu0 0.0
        %2069 = vmatprep.subr.mxu0 0.0
        %2070 = vmatpush1.msra.mxu0 0.0
        %2071 = vmatprep.subr.mxu0 0.0
        %2072 = vmatpush1.msra.mxu0 0.0
        %2073 = vmatprep.subr.mxu0 0.0
        %2074 = vmatpush1.msra.mxu0 0.0
        %2075 = vmatprep.subr.mxu0 0.0
        %2076 = vmatpush1.msra.mxu0 0.0
        %2077 = vmatprep.subr.mxu0 0.0
        %2078 = vmatpush1.msra.mxu0 0.0
        %2079 = vmatprep.subr.mxu0 0.0
        %2080 = vmatpush1.msra.mxu0 0.0
        %2081 = vmatprep.subr.mxu0 0.0
        %2082 = vmatpush1.msra.mxu0 0.0
        %2083 = vmatprep.subr.mxu0 0.0
        %2084 = vmatpush1.msra.mxu0 0.0
        %2085 = vmatprep.subr.mxu0 0.0
        %2086 = vmatpush1.msra.mxu0 0.0
        %2087 = vmatprep.subr.mxu0 0.0
        %2088 = vmatpush1.msra.mxu0 0.0
        %2089 = vmatprep.subr.mxu0 0.0
        %2090 = vmatpush1.msra.mxu0 0.0
        %2091 = vmatprep.subr.mxu0 0.0
        %2092 = vmatpush1.msra.mxu0 0.0
        %2093 = vmatprep.subr.mxu0 0.0
        %2094 = vmatpush1.msra.mxu0 0.0
        %2095 = vmatprep.subr.mxu0 0.0
        %2096 = vmatpush1.msra.mxu0 0.0
        %2097 = vmatprep.subr.mxu0 0.0
        %2098 = vmatpush1.msra.mxu0 0.0
        %2099 = vmatprep.subr.mxu0 0.0
        %2100 = vmatpush1.msra.mxu0 0.0
        %2101 = vmatprep.subr.mxu0 0.0
        %2102 = vmatpush1.msra.mxu0 0.0
        %2103 = vmatprep.subr.mxu0 0.0
        %2104 = vmatpush1.msra.mxu0 0.0
        %2105 = vmatprep.subr.mxu0 0.0
        %2106 = vmatpush1.msra.mxu0 0.0
        %2107 = vmatprep.subr.mxu0 0.0
        %2108 = vmatpush1.msra.mxu0 0.0
        %2109 = vmatprep.subr.mxu0 0.0
        %2110 = vmatpush1.msra.mxu0 0.0
        %2111 = vmatprep.subr.mxu0 0.0
        %2112 = vmatpush1.msra.mxu0 0.0
        %2113 = vmatprep.subr.mxu0 0.0
        %2114 = vmatpush1.msra.mxu0 0.0
        %2115 = vmatprep.subr.mxu0 0.0
        %2116 = vmatpush1.msra.mxu0 0.0
        %2117 = vmatprep.subr.mxu0 0.0
        %2118 = vmatpush1.msra.mxu0 0.0
        %2119 = vmatprep.mubr.f32.mxu0 0.0
        %2120 = vmatmul.mubr.f32.gmra.mrb[0].mxu0 %v2050
        %v2121 = vpop.f32.mrb[0].mxu0
        %v2122 = vadd.f32 0.0, %v2121
        %v2123 = vpop.f32.mrb[0].mxu0
        %2124 = vdwg.mxu0
        %v2125 = vadd.f32 %v1881, %v2122
        %2126 = vrot.lane.b32.xlu0 %v406, 100
        %v2127 = vpop.permute.xlu0 %2126
        %2128 = vrot.lane.b32.xlu0 %v406, 68
        %v2129 = vpop.permute.xlu0 %2128
        %v2130 = vsel %vm420, %v2127, 0
        %v2132 = vsel %vm420, %v2129, 0
        %2134 = vmatprep.subr.mxu0 0.0
        %2135 = vmatpush1.xpose.msra.mxu0 %v2132
        %2136 = vmatprep.subr.mxu0 0.0
        %2137 = vmatpush1.xpose.msra.mxu0 0.0
        %2138 = vmatprep.subr.mxu0 0.0
        %2139 = vmatpush1.xpose.msra.mxu0 0.0
        %2140 = vmatprep.subr.mxu0 0.0
        %2141 = vmatpush1.xpose.msra.mxu0 0.0
        %2142 = vmatprep.subr.mxu0 0.0
        %2143 = vmatpush1.xpose.msra.mxu0 0.0
        %2144 = vmatprep.subr.mxu0 0.0
        %2145 = vmatpush1.xpose.msra.mxu0 0.0
        %2146 = vmatprep.subr.mxu0 0.0
        %2147 = vmatpush1.xpose.msra.mxu0 0.0
        %2148 = vmatprep.subr.mxu0 0.0
        %2149 = vmatpush1.xpose.msra.mxu0 0.0
        %2150 = vmatprep.subr.mxu0 0.0
        %2151 = vmatpush1.xpose.msra.mxu0 0.0
        %2152 = vmatprep.subr.mxu0 0.0
        %2153 = vmatpush1.xpose.msra.mxu0 0.0
        %2154 = vmatprep.subr.mxu0 0.0
        %2155 = vmatpush1.xpose.msra.mxu0 0.0
        %2156 = vmatprep.subr.mxu0 0.0
        %2157 = vmatpush1.xpose.msra.mxu0 0.0
        %2158 = vmatprep.subr.mxu0 0.0
        %2159 = vmatpush1.xpose.msra.mxu0 0.0
        %2160 = vmatprep.subr.mxu0 0.0
        %2161 = vmatpush1.xpose.msra.mxu0 0.0
        %2162 = vmatprep.subr.mxu0 0.0
        %2163 = vmatpush1.xpose.msra.mxu0 0.0
        %2164 = vmatprep.subr.mxu0 0.0
        %2165 = vmatpush1.xpose.msra.mxu0 0.0
        %2166 = vmatprep.subr.mxu0 0.0
        %2167 = vmatpush1.xpose.msra.mxu0 0.0
        %2168 = vmatprep.subr.mxu0 0.0
        %2169 = vmatpush1.xpose.msra.mxu0 0.0
        %2170 = vmatprep.subr.mxu0 0.0
        %2171 = vmatpush1.xpose.msra.mxu0 0.0
        %2172 = vmatprep.subr.mxu0 0.0
        %2173 = vmatpush1.xpose.msra.mxu0 0.0
        %2174 = vmatprep.subr.mxu0 0.0
        %2175 = vmatpush1.xpose.msra.mxu0 0.0
        %2176 = vmatprep.subr.mxu0 0.0
        %2177 = vmatpush1.xpose.msra.mxu0 0.0
        %2178 = vmatprep.subr.mxu0 0.0
        %2179 = vmatpush1.xpose.msra.mxu0 0.0
        %2180 = vmatprep.subr.mxu0 0.0
        %2181 = vmatpush1.xpose.msra.mxu0 0.0
        %2182 = vmatprep.subr.mxu0 0.0
        %2183 = vmatpush1.xpose.msra.mxu0 0.0
        %2184 = vmatprep.subr.mxu0 0.0
        %2185 = vmatpush1.xpose.msra.mxu0 0.0
        %2186 = vmatprep.subr.mxu0 0.0
        %2187 = vmatpush1.xpose.msra.mxu0 0.0
        %2188 = vmatprep.subr.mxu0 0.0
        %2189 = vmatpush1.xpose.msra.mxu0 0.0
        %2190 = vmatprep.subr.mxu0 0.0
        %2191 = vmatpush1.xpose.msra.mxu0 0.0
        %2192 = vmatprep.subr.mxu0 0.0
        %2193 = vmatpush1.xpose.msra.mxu0 0.0
        %2194 = vmatprep.subr.mxu0 0.0
        %2195 = vmatpush1.xpose.msra.mxu0 0.0
        %2196 = vmatprep.subr.mxu0 0.0
        %2197 = vmatpush1.xpose.msra.mxu0 0.0
        %2198 = vmatprep.mubr.f32.mxu0 0.0
        %2199 = vmatmul.mubr.f32.gmra.mrb[0].mxu0 %v2130
        %v2200 = vpop.f32.mrb[0].mxu0
        %v2201 = vadd.f32 0.0, %v2200
        %v2202 = vpop.f32.mrb[0].mxu0
        %2203 = vdwg.mxu0
        %v2204 = vsel %vm495, %v2201, -inf
        %2205 = vmax.xlane.f32.xlu0 %v2204
        %v2206 = vpop.xlane.xlu0 %2205
        %v2207 = vsub.f32 %v2201, %v2206
        %v2208 = vmul.f32 %v2207, 1.442695
        %v2209 = vpow.pop %v2208
        %v2210 = vsel %vm495, %v2209, 0.0
        %2211 = vadd.xlane.f32.xlu0 %v2210
        %v2212 = vpop.xlane.xlu0 %2211
        %2213 = vrot.lane.b32.xlu0 %v406, 36
        %v2214 = vpop.permute.xlu0 %2213
        %v2217 = vsel %vm495, %v2209, 0
        %2219 = vmatprep.subr.mxu0 0.0
        %2220 = vmatpush1.msra.mxu0 %v2214
        %2221 = vmatprep.subr.mxu0 0.0
        %2222 = vmatpush1.msra.mxu0 0.0
        %2223 = vmatprep.subr.mxu0 0.0
        %2224 = vmatpush1.msra.mxu0 0.0
        %2225 = vmatprep.subr.mxu0 0.0
        %2226 = vmatpush1.msra.mxu0 0.0
        %2227 = vmatprep.subr.mxu0 0.0
        %2228 = vmatpush1.msra.mxu0 0.0
        %2229 = vmatprep.subr.mxu0 0.0
        %2230 = vmatpush1.msra.mxu0 0.0
        %2231 = vmatprep.subr.mxu0 0.0
        %2232 = vmatpush1.msra.mxu0 0.0
        %2233 = vmatprep.subr.mxu0 0.0
        %2234 = vmatpush1.msra.mxu0 0.0
        %2235 = vmatprep.subr.mxu0 0.0
        %2236 = vmatpush1.msra.mxu0 0.0
        %2237 = vmatprep.subr.mxu0 0.0
        %2238 = vmatpush1.msra.mxu0 0.0
        %2239 = vmatprep.subr.mxu0 0.0
        %2240 = vmatpush1.msra.mxu0 0.0
        %2241 = vmatprep.subr.mxu0 0.0
        %2242 = vmatpush1.msra.mxu0 0.0
        %2243 = vmatprep.subr.mxu0 0.0
        %2244 = vmatpush1.msra.mxu0 0.0
        %2245 = vmatprep.subr.mxu0 0.0
        %2246 = vmatpush1.msra.mxu0 0.0
        %2247 = vmatprep.subr.mxu0 0.0
        %2248 = vmatpush1.msra.mxu0 0.0
        %2249 = vmatprep.subr.mxu0 0.0
        %2250 = vmatpush1.msra.mxu0 0.0
        %2251 = vmatprep.subr.mxu0 0.0
        %2252 = vmatpush1.msra.mxu0 0.0
        %2253 = vmatprep.subr.mxu0 0.0
        %2254 = vmatpush1.msra.mxu0 0.0
        %2255 = vmatprep.subr.mxu0 0.0
        %2256 = vmatpush1.msra.mxu0 0.0
        %2257 = vmatprep.subr.mxu0 0.0
        %2258 = vmatpush1.msra.mxu0 0.0
        %2259 = vmatprep.subr.mxu0 0.0
        %2260 = vmatpush1.msra.mxu0 0.0
        %2261 = vmatprep.subr.mxu0 0.0
        %2262 = vmatpush1.msra.mxu0 0.0
        %2263 = vmatprep.subr.mxu0 0.0
        %2264 = vmatpush1.msra.mxu0 0.0
        %2265 = vmatprep.subr.mxu0 0.0
        %2266 = vmatpush1.msra.mxu0 0.0
        %2267 = vmatprep.subr.mxu0 0.0
        %2268 = vmatpush1.msra.mxu0 0.0
        %2269 = vmatprep.subr.mxu0 0.0
        %2270 = vmatpush1.msra.mxu0 0.0
        %2271 = vmatprep.subr.mxu0 0.0
        %2272 = vmatpush1.msra.mxu0 0.0
        %2273 = vmatprep.subr.mxu0 0.0
        %2274 = vmatpush1.msra.mxu0 0.0
        %2275 = vmatprep.subr.mxu0 0.0
        %2276 = vmatpush1.msra.mxu0 0.0
        %2277 = vmatprep.subr.mxu0 0.0
        %2278 = vmatpush1.msra.mxu0 0.0
        %2279 = vmatprep.subr.mxu0 0.0
        %2280 = vmatpush1.msra.mxu0 0.0
        %2281 = vmatprep.subr.mxu0 0.0
        %2282 = vmatpush1.msra.mxu0 0.0
        %2283 = vmatprep.mubr.f32.mxu0 0.0
        %2284 = vmatmul.mubr.f32.gmra.mrb[0].mxu0 %v2217
        %v2285 = vpop.f32.mrb[0].mxu0
        %v2286 = vadd.f32 0.0, %v2285
        %v2287 = vpop.f32.mrb[0].mxu0
        %2288 = vdwg.mxu0
        %v2289 = vrcp.pop %v2212
        %v2290 = vmul.f32 %v2286, %v2289
        %s2291 = scalar_lea.vmem [#allocation7], 28
        %v2292 = vld [vmem:[%s2291] sm:$0xf]
        %v2294 = vsel %vm420, %v2290, 0
        %v2297 = vsel %vm587, %v2292, 0
        %2299 = vmatprep.subr.mxu0 0.0
        %2300 = vmatpush1.msra.mxu0 %v2297
        %2301 = vmatprep.subr.mxu0 0.0
        %2302 = vmatpush1.msra.mxu0 0.0
        %2303 = vmatprep.subr.mxu0 0.0
        %2304 = vmatpush1.msra.mxu0 0.0
        %2305 = vmatprep.subr.mxu0 0.0
        %2306 = vmatpush1.msra.mxu0 0.0
        %2307 = vmatprep.subr.mxu0 0.0
        %2308 = vmatpush1.msra.mxu0 0.0
        %2309 = vmatprep.subr.mxu0 0.0
        %2310 = vmatpush1.msra.mxu0 0.0
        %2311 = vmatprep.subr.mxu0 0.0
        %2312 = vmatpush1.msra.mxu0 0.0
        %2313 = vmatprep.subr.mxu0 0.0
        %2314 = vmatpush1.msra.mxu0 0.0
        %2315 = vmatprep.subr.mxu0 0.0
        %2316 = vmatpush1.msra.mxu0 0.0
        %2317 = vmatprep.subr.mxu0 0.0
        %2318 = vmatpush1.msra.mxu0 0.0
        %2319 = vmatprep.subr.mxu0 0.0
        %2320 = vmatpush1.msra.mxu0 0.0
        %2321 = vmatprep.subr.mxu0 0.0
        %2322 = vmatpush1.msra.mxu0 0.0
        %2323 = vmatprep.subr.mxu0 0.0
        %2324 = vmatpush1.msra.mxu0 0.0
        %2325 = vmatprep.subr.mxu0 0.0
        %2326 = vmatpush1.msra.mxu0 0.0
        %2327 = vmatprep.subr.mxu0 0.0
        %2328 = vmatpush1.msra.mxu0 0.0
        %2329 = vmatprep.subr.mxu0 0.0
        %2330 = vmatpush1.msra.mxu0 0.0
        %2331 = vmatprep.subr.mxu0 0.0
        %2332 = vmatpush1.msra.mxu0 0.0
        %2333 = vmatprep.subr.mxu0 0.0
        %2334 = vmatpush1.msra.mxu0 0.0
        %2335 = vmatprep.subr.mxu0 0.0
        %2336 = vmatpush1.msra.mxu0 0.0
        %2337 = vmatprep.subr.mxu0 0.0
        %2338 = vmatpush1.msra.mxu0 0.0
        %2339 = vmatprep.subr.mxu0 0.0
        %2340 = vmatpush1.msra.mxu0 0.0
        %2341 = vmatprep.subr.mxu0 0.0
        %2342 = vmatpush1.msra.mxu0 0.0
        %2343 = vmatprep.subr.mxu0 0.0
        %2344 = vmatpush1.msra.mxu0 0.0
        %2345 = vmatprep.subr.mxu0 0.0
        %2346 = vmatpush1.msra.mxu0 0.0
        %2347 = vmatprep.subr.mxu0 0.0
        %2348 = vmatpush1.msra.mxu0 0.0
        %2349 = vmatprep.subr.mxu0 0.0
        %2350 = vmatpush1.msra.mxu0 0.0
        %2351 = vmatprep.subr.mxu0 0.0
        %2352 = vmatpush1.msra.mxu0 0.0
        %2353 = vmatprep.subr.mxu0 0.0
        %2354 = vmatpush1.msra.mxu0 0.0
        %2355 = vmatprep.subr.mxu0 0.0
        %2356 = vmatpush1.msra.mxu0 0.0
        %2357 = vmatprep.subr.mxu0 0.0
        %2358 = vmatpush1.msra.mxu0 0.0
        %2359 = vmatprep.subr.mxu0 0.0
        %2360 = vmatpush1.msra.mxu0 0.0
        %2361 = vmatprep.subr.mxu0 0.0
        %2362 = vmatpush1.msra.mxu0 0.0
        %2363 = vmatprep.mubr.f32.mxu0 0.0
        %2364 = vmatmul.mubr.f32.gmra.mrb[0].mxu0 %v2294
        %v2365 = vpop.f32.mrb[0].mxu0
        %v2366 = vadd.f32 0.0, %v2365
        %v2367 = vpop.f32.mrb[0].mxu0
        %2368 = vdwg.mxu0
        %v2369 = vadd.f32 %v2125, %v2366
        %v2370 = vsel %vm335, %v2369, 0.0
        %2371 = vadd.xlane.f32.xlu0 %v2370
        %v2372 = vpop.xlane.xlu0 %2371
        %v2373 = vrcp.pop 32.0
        %v2374 = vmul.f32 %v2372, %v2373
        %v2375 = vsub.f32 %v2369, %v2374
        %v2376 = vmul.f32 %v2375, %v2375
        %v2377 = vsel %vm335, %v2376, 0.0
        %2378 = vadd.xlane.f32.xlu0 %v2377
        %v2379 = vpop.xlane.xlu0 %2378
        %v2380 = vmul.f32 %v2379, %v2373
        %v2381 = vadd.f32 %v2380, 1e-05
        %v2382 = vrsqrt.pop %v2381
        %v2383 = vmul.f32 %v2375, %v2382
        %v2384 = vld [vmem:[%s5] sm:$0x1]
        %v2386 = vlaneseq
        %v2387 = vshrl.u32 %v2386, 7
        %v2388 = vsub.s32 0, %v2387
        %v2389 = vrot.slane %v2384, %v2388
        %v2391 = vmul.f32 %v2383, %v2389
        %v2392 = vld [vmem:[%s6] sm:$0x1]
        %v2394 = vlaneseq
        %v2395 = vshrl.u32 %v2394, 7
        %v2396 = vsub.s32 0, %v2395
        %v2397 = vrot.slane %v2392, %v2396
        %v2399 = vadd.f32 %v2391, %v2397
        %2400 = vst.msk [vmem:[%s322] sm:$0xff] %vm335, %v2399
        %s2401 = sand.u32 %s185, 1
        %s2402 = scalar_lea.sflag [#allocation4], %s2401
        %s2403 = sand.u32 %s185, 1
        %s2404 = smul.addr %s2403, 8
        %s2405 = scalar_lea.vmem [#allocation8], %s2404
        // Predicated region
        $region61: #{tpu_custom_call.1} parent=47 // pred_check
          %p2406 = pneg %p195
        $region62: #{tpu_custom_call.1} parent=47 // pred_check_branch
          %2408 = sbr.rel (%p2406) target = $region64
        $region63: #{tpu_custom_call.1} parent=47 // pred_region
          %s2410 = ssub.s32 128, 128
          %2411 = vsyncadd %s2402, %s2410
          %s2412 = smul.addr %s25, 128
          %s2413 = scalar_lea.hbm %s7, %s2412
          %s2415 = sshll.u32 %s2405, 4
          %s2416 = int_to_ptr.vmem [resolvable:$true] %s2415
          %2418 = dma.vmem_to_hbm [thread:$0]  %s2416, 128, %s2413, %s2402
        $region64: #{tpu_custom_call.1} parent=47 // pred_fallthru
          _
      $region48: #{tpu_custom_call.1} parent=5 // pred_fallthru
        _
      %p2419 = scmp.le.s32.totalorder 2, %s20
      // Predicated region
      $region65: #{tpu_custom_call.1} parent=5 // pred_check
        %p2420 = pneg %p2419
      $region66: #{tpu_custom_call.1} parent=5 // pred_check_branch
        %2422 = sbr.rel (%p2420) target = $region68
      $region67: #{tpu_custom_call.1} parent=5 // pred_region
        %s2423 = ssub.s32 %s20, 2
        // Predicated region
        $region69: #{tpu_custom_call.1} parent=67 // pred_check
          %p2424 = pneg %p201
        $region70: #{tpu_custom_call.1} parent=67 // pred_check_branch
          %2426 = sbr.rel (%p2424) target = $region72
        $region71: #{tpu_custom_call.1} parent=67 // pred_region
          %s2427 = sand.u32 %s186, 1
          %s2428 = scalar_lea.sflag [#allocation4], %s2427
          %s2429 = sand.u32 %s186, 1
          %s2430 = smul.addr %s2429, 8
          %s2431 = scalar_lea.vmem [#allocation8], %s2430
          %2432 = dma.done %s2428, 128
        $region72: #{tpu_custom_call.1} parent=67 // pred_fallthru
          _
      $region68: #{tpu_custom_call.1} parent=5 // pred_fallthru
        _
    $region6: #{tpu_custom_call.1} parent=1 // loop_footer
      %s24 = sadd.s32 1, %s20
    $region7: #{tpu_custom_call.1} parent=1 // loop_footer_branch
      %19 = sbr.rel target = $region3
    $region8: #{tpu_custom_call.1} parent=1 // loop_exit
      _
    %2433 = vsyncpa [#allocation3], 1
    %s2434 = scalar_lea.sflag [#allocation3], 1
    %2435 = vsyncpa %s2434, 1
    %2436 = vsyncpa [#allocation6], 1
    %2437 = vsyncpa [#allocation4], 1
    %s2438 = scalar_lea.sflag [#allocation4], 1
    %2439 = vsyncpa %s2438, 1

</llo_original>
